<compile_context>
chip_gen: v6e
topology: v6e:2x2x1
jax: 0.10.0
libtpu: 0.0.40
codegen_flags: <defaults>
</compile_context>

<pallas_src>
import functools

import jax
import jax.numpy as jnp
from jax.experimental import pallas as pl
from jax.experimental.pallas import tpu as pltpu


# --------------------------------------------------------------------------
# Fused kernel: K x (A @ X) * 1/deg  ->  MLP  ->  mean-pool  -> classifier
#               -> softmax -> consistency + entropy losses.
# Grid = (K propagation steps, node row-blocks, node col-blocks[reduction]).
# --------------------------------------------------------------------------
def _grandpp_fused_kernel(K, nI, nK, TM, TK, n_views, n_classes, lam,
                          x_hbm, a_ref, invdeg_ref,
                          w1_ref, b1_ref, w2_ref, b2_ref, p_ref,
                          wc_ref, bc_ref,
                          logits_ref, loss_ref,
                          x_scr, acc_ref, pool_acc):
    s = pl.program_id(0)          # propagation step
    i = pl.program_id(1)          # node row-block
    k = pl.program_id(2)          # node col-block (reduction)

    # Prologue: one DMA of the fused bf16 view features into ping-pong slot 0.
    @pl.when((s == 0) & (i == 0) & (k == 0))
    def _():
        pltpu.sync_copy(x_hbm, x_scr.at[0])

    @pl.when(k == 0)
    def _():
        acc_ref[...] = jnp.zeros_like(acc_ref)

    # Step s reads slot s%2 and writes slot (s+1)%2 of the VMEM-resident X.
    src = s % 2
    col = pl.multiple_of(k * TK, TK)
    x_blk = x_scr[src, pl.ds(col, TK), :]                    # (TK, VF) bf16

    # bf16 count-matmul with f32 accumulation.
    acc_ref[...] += jnp.dot(a_ref[...], x_blk, preferred_element_type=jnp.float32)

    @pl.when(k == nK - 1)
    def _():
        row = pl.multiple_of(i * TM, TM)
        # Normalized new row block of X(s+1), computed (and cast) once.
        x_new = (acc_ref[...] * invdeg_ref[...]).astype(jnp.bfloat16)

        @pl.when(s < K - 1)
        def _():
            x_scr[1 - src, pl.ds(row, TM), :] = x_new

        # Final propagation step: MLP + mean-pool accumulation (+ epilogue).
        @pl.when(s == K - 1)
        def _():
            h = jnp.dot(x_new, w1_ref[...],
                        preferred_element_type=jnp.float32) + b1_ref[...]
            h = jnp.maximum(h, 0.0).astype(jnp.bfloat16)               # ReLU
            h = jnp.dot(h, w2_ref[...],
                        preferred_element_type=jnp.float32) + b2_ref[...]
            contrib = jnp.dot(p_ref[...], h.astype(jnp.bfloat16),
                              preferred_element_type=jnp.float32)      # (G, V*H)

            @pl.when(i == 0)
            def _():
                pool_acc[...] = jnp.zeros_like(pool_acc)

            pool_acc[...] += contrib

            # Last row-block: classifier on every view (one block-diag matmul),
            # per-view softmax, consistency + entropy losses.
            @pl.when(i == nI - 1)
            def _():
                feats = pool_acc[...]                                   # (G, V*H)
                z_all = jnp.dot(feats.astype(jnp.bfloat16), wc_ref[...],
                                preferred_element_type=jnp.float32) + bc_ref[...]
                logits_ref[...] = z_all[:, :n_classes]                  # view 0

                probs = []
                for v in range(n_views):
                    z = z_all[:, v * n_classes:(v + 1) * n_classes]
                    z = z - jnp.max(z, axis=-1, keepdims=True)
                    e = jnp.exp(z)
                    probs.append(e / jnp.sum(e, axis=-1, keepdims=True))
                mean_p = sum(probs) / float(n_views)                    # (G, C)

                loss_cons = sum(
                    jnp.mean(jnp.sum((p - mean_p) ** 2, axis=-1, keepdims=True),
                             keepdims=True)
                    for p in probs) / float(n_views)                    # (1, 1)
                loss_ent = -jnp.mean(
                    jnp.sum(mean_p * jnp.log(mean_p + 1e-8), axis=-1,
                            keepdims=True),
                    keepdims=True)                                      # (1, 1)
                loss_ref[...] = lam * loss_cons + loss_ent


# --------------------------------------------------------------------------
# VMEM-budget-aware tile planning.
# --------------------------------------------------------------------------
def _vmem_capacity_bytes():
    try:
        return int(pltpu.get_tpu_info().vmem_capacity_bytes)
    except Exception:
        return 64 << 20        # conservative fallback: v7x per-TC VMEM


def _estimate_vmem(n_pad, vf_pad, vh, g, vc, tm, tk):
    a_bytes = 2 * tm * tk * 2                       # A block (bf16, double-buffered)
    x_scr = 2 * n_pad * vf_pad * 2                  # bf16 ping-pong X
    acc = tm * vf_pad * 4                           # f32 row-block accumulator
    pool_blk = 2 * g * tm * 2                       # pooling columns (bf16, 2 bufs)
    weights = 2 * (vf_pad * vh + vh * vh + vh * vc) * 2
    misc = 2 * tm * 4 + g * vh * 4 + (1 << 20)      # 1/deg, pooled acc, slack
    return a_bytes + x_scr + acc + pool_blk + weights + misc


def _plan_tiles(n_pad, vf_pad, vh, g, vc, vmem_cap):
    """Pick (TM, vmem_limit_bytes).  Prefer a fully VMEM-resident A (streamed
    from HBM once instead of K times) when it fits under ~70% of VMEM; this
    threshold is generation-dependent (128 MiB on v5e/v6e, 64 MiB on v7x)."""
    budget = int(vmem_cap * 0.7)
    if _estimate_vmem(n_pad, vf_pad, vh, g, vc, n_pad, n_pad) <= budget:
        tm = n_pad
    else:
        tm = 128
        for cand in (512, 256, 128):
            if n_pad % cand == 0 and \
               _estimate_vmem(n_pad, vf_pad, vh, g, vc, cand, cand) <= budget:
                tm = cand
                break
    need = _estimate_vmem(n_pad, vf_pad, vh, g, vc, tm, tm)
    limit = int(min(max(need * 1.5 + (4 << 20), 32 << 20), vmem_cap - (4 << 20)))
    return tm, limit


def grandpp_fused_forward(x_fused, a_counts, inv_deg, w1_blk, b1_t, w2_blk, b2_t,
                          pool, wc_blk, bc_t, K, n_views, n_classes, lam):
    N_pad, VF_pad = x_fused.shape
    VH = w1_blk.shape[1]
    G = pool.shape[0]
    VC = wc_blk.shape[1]

    vmem_cap = _vmem_capacity_bytes()
    TM, vmem_limit = _plan_tiles(N_pad, VF_pad, VH, G, VC, vmem_cap)
    TK = TM
    nI, nK = N_pad // TM, N_pad // TK
    resident_a = (TM == N_pad)

    kern = functools.partial(_grandpp_fused_kernel, K, nI, nK, TM, TK,
                             n_views, n_classes, lam)

    flops = (2 * K * N_pad * N_pad * VF_pad            # K propagation matmuls
             + 2 * N_pad * VF_pad * VH + 2 * N_pad * VH * VH   # MLP
             + 2 * G * N_pad * VH                       # pooling
             + 2 * G * VH * VC)                         # classifier
    a_streams = 1 if resident_a else K
    bytes_accessed = (a_streams * N_pad * N_pad * 2    # A (bf16)
                      + 2 * N_pad * VF_pad             # fused view features (bf16)
                      + 4 * N_pad                      # 1/deg
                      + 2 * (VF_pad * VH + VH * VH + VH * VC + G * N_pad)
                      + 4 * (G * n_classes + 1))       # logits + loss (f32)

    return pl.pallas_call(
        kern,
        out_shape=(jax.ShapeDtypeStruct((G, n_classes), jnp.float32),
                   jax.ShapeDtypeStruct((1, 1), jnp.float32)),
        grid=(K, nI, nK),
        in_specs=[
            pl.BlockSpec(memory_space=pl.ANY),                  # fused views, HBM
            pl.BlockSpec((TM, TK), lambda s, i, k: (i, k)),     # A edge-count tile
            pl.BlockSpec((TM, 1), lambda s, i, k: (i, 0)),      # 1/deg rows
            pl.BlockSpec((VF_pad, VH), lambda s, i, k: (0, 0)), # block-diag W1
            pl.BlockSpec((1, VH), lambda s, i, k: (0, 0)),      # tiled b1
            pl.BlockSpec((VH, VH), lambda s, i, k: (0, 0)),     # block-diag W2
            pl.BlockSpec((1, VH), lambda s, i, k: (0, 0)),      # tiled b2
            pl.BlockSpec((G, TM), lambda s, i, k: (0, i)),      # pooling columns
            pl.BlockSpec((VH, VC), lambda s, i, k: (0, 0)),     # block-diag Wc
            pl.BlockSpec((1, VC), lambda s, i, k: (0, 0)),      # tiled bc
        ],
        out_specs=(pl.BlockSpec((G, n_classes), lambda s, i, k: (0, 0)),
                   pl.BlockSpec((1, 1), lambda s, i, k: (0, 0))),
        scratch_shapes=[
            pltpu.VMEM((2, N_pad, VF_pad), jnp.bfloat16),   # bf16 ping-pong X
            pltpu.VMEM((TM, VF_pad), jnp.float32),          # f32 A@X accumulator
            pltpu.VMEM((G, VH), jnp.float32),               # pooled feats accumulator
        ],
        # Output + X scratch are carried across every axis -> all "arbitrary".
        # TODO(synk): v7x dual-TensorCore split of the row-block axis requires a
        # cross-core exchange of X(s) row halves + pooled-accumulator reduction.
        compiler_params=pltpu.CompilerParams(
            dimension_semantics=("arbitrary", "arbitrary", "arbitrary"),
            vmem_limit_bytes=int(vmem_limit)),
        cost_estimate=pl.CostEstimate(
            flops=int(flops), transcendentals=int(2 * G * VC),
            bytes_accessed=int(bytes_accessed)),
    )(x_fused, a_counts, inv_deg, w1_blk, b1_t, w2_blk, b2_t, pool, wc_blk, bc_t)


# --------------------------------------------------------------------------
# Plain-JAX glue: adjacency / pooling construction, dropout, drop_node, lane
# packing of views, block-diagonal weight expansion, padding to (8,128) tiles.
# --------------------------------------------------------------------------
def grandpp_forward(
    x, edge_index, batch, num_graphs, params, key,
    K=3, dropout=0.5, dropnode_rate=0.5, n_views=4, lam_consistency=1.0,
):
    (w1, b1), (w2, b2), (wc, bc) = params
    N, F = x.shape
    H = w1.shape[1]
    C = wc.shape[1]
    V = n_views

    N_pad = ((N + 127) // 128) * 128
    VF, VH, VC = V * F, V * H, V * C
    VF_pad = ((VF + 127) // 128) * 128
    VH_pad = ((VH + 127) // 128) * 128

    # F.dropout (training=True): zero with prob p, scale survivors by 1/(1-p).
    k_drop, *k_views = jax.random.split(key, 1 + n_views)
    keep = jax.random.bernoulli(k_drop, 1.0 - dropout, x.shape)
    x = jnp.where(keep, x / (1.0 - dropout), 0.0).astype(jnp.float32)

    # Dense adjacency COUNTS with self loops (row-degree normalization is
    # applied in f32 inside the kernel): A_norm[r, c] = #edges(r, c) / deg(r).
    # Matches the reference scatter_add with norm = 1/deg[row]; padded rows and
    # columns are zero (padded deg clamps to 1 -> padded nodes stay zero).
    row, col = edge_index
    self_idx = jnp.arange(N, dtype=row.dtype)
    row_sl = jnp.concatenate([row, self_idx])
    col_sl = jnp.concatenate([col, self_idx])
    deg = jnp.maximum(jnp.zeros((N_pad,), jnp.float32).at[row_sl].add(1.0), 1.0)
    a_counts = jnp.zeros((N_pad, N_pad), jnp.float32).at[row_sl, col_sl].add(1.0)
    inv_deg = (1.0 / deg)[:, None]                                   # (N_pad, 1)

    # Dense global_mean_pool matrix P (G, N_pad): P[g, n] = 1/|graph g|.
    counts = jnp.maximum(
        jnp.zeros((num_graphs,), jnp.float32).at[batch].add(1.0), 1.0)
    pool = jnp.zeros((num_graphs, N_pad), jnp.float32)
    pool = pool.at[batch, jnp.arange(N)].set(1.0) / counts[:, None]

    # drop_node per view (no 1/(1-p) rescale — matches the reference); pack the
    # views along lanes: X_fused[:, v*F:(v+1)*F] = view v, zero-pad to 128 lanes.
    masks = [(jax.random.uniform(kv, (N,)) >= dropnode_rate).astype(jnp.float32)
             for kv in k_views]
    x_fused = jnp.concatenate([x * m[:, None] for m in masks], axis=1)  # (N, V*F)
    x_fused = jnp.pad(x_fused, ((0, N_pad - N), (0, VF_pad - VF)))

    # Block-diagonal / tiled weights so all views share one wide MXU matmul;
    # zero-padded rows/cols keep the padded lanes inert.
    eye_v = jnp.eye(V, dtype=jnp.float32)
    w1_blk = jnp.pad(jnp.kron(eye_v, w1), ((0, VF_pad - VF), (0, VH_pad - VH)))
    w2_blk = jnp.pad(jnp.kron(eye_v, w2), ((0, VH_pad - VH), (0, VH_pad - VH)))
    wc_blk = jnp.pad(jnp.kron(eye_v, wc), ((0, VH_pad - VH), (0, 0)))
    b1_t = jnp.pad(jnp.tile(b1, (1, V)), ((0, 0), (0, VH_pad - VH)))
    b2_t = jnp.pad(jnp.tile(b2, (1, V)), ((0, 0), (0, VH_pad - VH)))
    bc_t = jnp.tile(bc, (1, V))

    logits, loss = grandpp_fused_forward(
        x_fused.astype(jnp.bfloat16), a_counts.astype(jnp.bfloat16), inv_deg,
        w1_blk.astype(jnp.bfloat16), b1_t, w2_blk.astype(jnp.bfloat16), b2_t,
        pool.astype(jnp.bfloat16), wc_blk.astype(jnp.bfloat16), bc_t,
        K, V, C, lam_consistency)
    return logits, loss[0, 0]


def _linear_init(key, fan_in, fan_out):
    # PyTorch nn.Linear default: U(-1/sqrt(fan_in), 1/sqrt(fan_in)) for W and b.
    kw, kb = jax.random.split(key)
    bound = 1.0 / float(fan_in) ** 0.5
    w = jax.random.uniform(kw, (fan_in, fan_out), jnp.float32, -bound, bound)
    b = jax.random.uniform(kb, (1, fan_out), jnp.float32, -bound, bound)
    return w, b


if __name__ == "__main__":
    # Small shapes consistent with the module's graph-level forward:
    # 16 nodes in 2 graphs, in_channels=8, hidden_channels=32, out_channels=4.
    N, F_IN, HID, C = 16, 8, 32, 4
    NUM_GRAPHS, K, N_VIEWS = 2, 3, 4

    key = jax.random.PRNGKey(0)
    k_x, k_p1, k_p2, k_p3, k_fwd = jax.random.split(key, 5)

    # Node features
    x = jax.random.normal(k_x, (N, F_IN), jnp.float32)

    # Two 8-node ring graphs (bidirectional edges), PyG-style edge_index (2, E)
    edges = []
    for g in range(NUM_GRAPHS):
        base = g * 8
        for i in range(8):
            a_, b_ = base + i, base + (i + 1) % 8
            edges.append((a_, b_))
            edges.append((b_, a_))
    edge_index = jnp.array(edges, dtype=jnp.int32).T
    batch = jnp.array([0] * 8 + [1] * 8, dtype=jnp.int32)

    # Deterministic parameter init (mlp.fc1, mlp.fc2, classifier)
    params = (
        _linear_init(k_p1, F_IN, HID),
        _linear_init(k_p2, HID, HID),
        _linear_init(k_p3, HID, C),
    )

    logits, loss = grandpp_forward(
        x, edge_index, batch, NUM_GRAPHS, params, k_fwd,
        K=K, dropout=0.5, dropnode_rate=0.5, n_views=N_VIEWS, lam_consistency=1.0,
    )
    jax.block_until_ready((logits, loss))
    assert logits.shape == (NUM_GRAPHS, C)
    assert loss.shape == ()
    assert bool(jnp.all(jnp.isfinite(logits))) and bool(jnp.isfinite(loss))
    print("KERNEL_OK")
</pallas_src>

<mosaic_0001>
module attributes {stable_mosaic.version = 11 : i64} {
  func.func @_grandpp_fused_kernel(%arg0: i32, %arg1: i32, %arg2: i32, %arg3: memref<128x128xbf16, #tpu.memory_space<any>>, %arg4: memref<128x128xbf16, #tpu.memory_space<vmem>>, %arg5: memref<128x1xf32, #tpu.memory_space<vmem>>, %arg6: memref<128x128xbf16, #tpu.memory_space<vmem>>, %arg7: memref<1x128xf32, #tpu.memory_space<vmem>>, %arg8: memref<128x128xbf16, #tpu.memory_space<vmem>>, %arg9: memref<1x128xf32, #tpu.memory_space<vmem>>, %arg10: memref<2x128xbf16, #tpu.memory_space<vmem>>, %arg11: memref<128x16xbf16, #tpu.memory_space<vmem>>, %arg12: memref<1x16xf32, #tpu.memory_space<vmem>>, %arg13: memref<2x4xf32, #tpu.memory_space<vmem>>, %arg14: memref<1x1xf32, #tpu.memory_space<vmem>>, %arg15: memref<2x128x128xbf16, #tpu.memory_space<vmem>>, %arg16: memref<128x128xf32, #tpu.memory_space<vmem>>, %arg17: memref<2x128xf32, #tpu.memory_space<vmem>>) attributes {dimension_semantics = [#tpu.dimension_semantics<arbitrary>, #tpu.dimension_semantics<arbitrary>, #tpu.dimension_semantics<arbitrary>], iteration_bounds = array<i64: 3, 1, 1>, scalar_prefetch = 0 : i64, scratch_operands = 3 : i64, tpu.core_type = #tpu.core_type<tc>, window_params = [{}, {transform_indices = @transform_1, window_bounds = array<i64: 128, 128>}, {transform_indices = @transform_2, window_bounds = array<i64: 128, 1>}, {pipeline_mode = #tpu.pipeline_mode<synchronous>, transform_indices = @transform_3, window_bounds = array<i64: 128, 128>}, {pipeline_mode = #tpu.pipeline_mode<synchronous>, transform_indices = @transform_4, window_bounds = array<i64: 1, 128>}, {pipeline_mode = #tpu.pipeline_mode<synchronous>, transform_indices = @transform_5, window_bounds = array<i64: 128, 128>}, {pipeline_mode = #tpu.pipeline_mode<synchronous>, transform_indices = @transform_6, window_bounds = array<i64: 1, 128>}, {transform_indices = @transform_7, window_bounds = array<i64: 2, 128>}, {pipeline_mode = #tpu.pipeline_mode<synchronous>, transform_indices = @transform_8, window_bounds = array<i64: 128, 16>}, {pipeline_mode = #tpu.pipeline_mode<synchronous>, transform_indices = @transform_9, window_bounds = array<i64: 1, 16>}, {pipeline_mode = #tpu.pipeline_mode<synchronous>, transform_indices = @transform_10, window_bounds = array<i64: 2, 4>}, {pipeline_mode = #tpu.pipeline_mode<synchronous>, transform_indices = @transform_11, window_bounds = array<i64: 1, 1>}]} {
    %c0_i32 = arith.constant 0 : i32
    %0 = arith.cmpi eq, %arg0, %c0_i32 : i32
    %c0_i32_0 = arith.constant 0 : i32
    %1 = arith.cmpi eq, %arg1, %c0_i32_0 : i32
    %2 = arith.andi %0, %1 : i1
    %c0_i32_1 = arith.constant 0 : i32
    %3 = arith.cmpi eq, %arg2, %c0_i32_1 : i32
    %4 = arith.andi %2, %3 : i1
    %5 = arith.extui %4 : i1 to i32
    %c0_i32_2 = arith.constant 0 : i32
    %6 = arith.cmpi ne, %5, %c0_i32_2 : i32
    scf.if %6 {
      %c0_i32_17 = arith.constant 0 : i32
      "tpu.region"() ({
        %34 = tpu.sem_alloc : memref<!tpu.dma_semaphore, #tpu.memory_space<semaphore_mem>>
        %c0_i32_18 = arith.constant 0 : i32
        %c0_i32_19 = arith.constant 0 : i32
        %35 = tpu.memref_slice %arg15[%c0_i32_17, %c0_i32_18, %c0_i32_19] : memref<2x128x128xbf16, #tpu.memory_space<vmem>> -> memref<1x128x128xbf16, #tpu.memory_space<vmem>>
        %36 = tpu.memref_squeeze %35 : memref<1x128x128xbf16, #tpu.memory_space<vmem>> -> memref<128x128xbf16, #tpu.memory_space<vmem>>
        tpu.enqueue_dma source(%arg3 : memref<128x128xbf16, #tpu.memory_space<any>>) target(%36 : memref<128x128xbf16, #tpu.memory_space<vmem>>) target_semaphore(%34 : memref<!tpu.dma_semaphore, #tpu.memory_space<semaphore_mem>>)
        %c0_i32_20 = arith.constant 0 : i32
        %c0_i32_21 = arith.constant 0 : i32
        %37 = tpu.memref_slice %arg15[%c0_i32_17, %c0_i32_20, %c0_i32_21] : memref<2x128x128xbf16, #tpu.memory_space<vmem>> -> memref<1x128x128xbf16, #tpu.memory_space<vmem>>
        %38 = tpu.memref_squeeze %37 : memref<1x128x128xbf16, #tpu.memory_space<vmem>> -> memref<128x128xbf16, #tpu.memory_space<vmem>>
        tpu.wait_dma2 semaphore(%34 : memref<!tpu.dma_semaphore, #tpu.memory_space<semaphore_mem>>) src(%arg3 : memref<128x128xbf16, #tpu.memory_space<any>>) dst(%38 : memref<128x128xbf16, #tpu.memory_space<vmem>>)
        tpu.yield
      }) : () -> ()
    } else {
    }
    %c0_i32_3 = arith.constant 0 : i32
    %7 = arith.cmpi eq, %arg2, %c0_i32_3 : i32
    %8 = arith.extui %7 : i1 to i32
    %c0_i32_4 = arith.constant 0 : i32
    %9 = arith.cmpi ne, %8, %c0_i32_4 : i32
    scf.if %9 {
      %cst_17 = arith.constant 0.000000e+00 : f32
      %34 = vector.broadcast %cst_17 : f32 to vector<128x128xf32>
      %c0_18 = arith.constant 0 : index
      %c0_19 = arith.constant 0 : index
      %35 = vector.load %arg16[%c0_18, %c0_19] : memref<128x128xf32, #tpu.memory_space<vmem>>, vector<128x128xf32>
      tpu.vector_store %arg16[%c0_18, %c0_19], %34 {strides = array<i32>} : memref<128x128xf32, #tpu.memory_space<vmem>>, vector<128x128xf32>,
    } else {
    }
    %c2_i32 = arith.constant 2 : i32
    %c0_i32_5 = arith.constant 0 : i32
    %10 = arith.cmpi eq, %c2_i32, %c0_i32_5 : i32
    %c1_i32 = arith.constant 1 : i32
    %11 = arith.select %10, %c1_i32, %c2_i32 : i32
    %12 = arith.remsi %arg0, %11 : i32
    %c0_i32_6 = arith.constant 0 : i32
    %13 = arith.cmpi ne, %12, %c0_i32_6 : i32
    %c0_i32_7 = arith.constant 0 : i32
    %14 = arith.cmpi slt, %12, %c0_i32_7 : i32
    %c0_i32_8 = arith.constant 0 : i32
    %15 = arith.cmpi slt, %11, %c0_i32_8 : i32
    %16 = arith.xori %14, %15 : i1
    %17 = arith.andi %16, %13 : i1
    %18 = arith.addi %12, %11 : i32
    %19 = arith.select %17, %18, %12 : i32
    %c128_i32 = arith.constant 128 : i32
    %20 = arith.muli %arg2, %c128_i32 : i32
    %21 = tpu.assume_multiple %20, 128 : i32
    %22 = arith.index_cast %19 : i32 to index
    %23 = arith.index_cast %21 : i32 to index
    %c0 = arith.constant 0 : index
    %24 = vector.load %arg15[%22, %23, %c0] : memref<2x128x128xbf16, #tpu.memory_space<vmem>>, vector<1x128x128xbf16>
    %25 = vector.shape_cast %24 : vector<1x128x128xbf16> to vector<128x128xbf16>
    %c0_9 = arith.constant 0 : index
    %c0_10 = arith.constant 0 : index
    %26 = vector.load %arg16[%c0_9, %c0_10] : memref<128x128xf32, #tpu.memory_space<vmem>>, vector<128x128xf32>
    %c0_11 = arith.constant 0 : index
    %c0_12 = arith.constant 0 : index
    %27 = vector.load %arg4[%c0_11, %c0_12] : memref<128x128xbf16, #tpu.memory_space<vmem>>, vector<128x128xbf16>
    %cst = arith.constant dense<0.000000e+00> : vector<128x128xf32>
    %28 = tpu.matmul %27, %25, %cst {dimension_numbers = #tpu.dot_dimension_numbers<[1], [0], [0], [1], [0, 0, 1, 1], [], []>} : vector<128x128xbf16>, vector<128x128xbf16>, vector<128x128xf32> -> vector<128x128xf32>
    %29 = arith.addf %26, %28 : vector<128x128xf32>
    %c0_13 = arith.constant 0 : index
    %c0_14 = arith.constant 0 : index
    %30 = vector.load %arg16[%c0_13, %c0_14] : memref<128x128xf32, #tpu.memory_space<vmem>>, vector<128x128xf32>
    tpu.vector_store %arg16[%c0_13, %c0_14], %29 {strides = array<i32>} : memref<128x128xf32, #tpu.memory_space<vmem>>, vector<128x128xf32>,
    %c0_i32_15 = arith.constant 0 : i32
    %31 = arith.cmpi eq, %arg2, %c0_i32_15 : i32
    %32 = arith.extui %31 : i1 to i32
    %c0_i32_16 = arith.constant 0 : i32
    %33 = arith.cmpi ne, %32, %c0_i32_16 : i32
    scf.if %33 {
      %c128_i32_17 = arith.constant 128 : i32
      %34 = arith.muli %arg1, %c128_i32_17 : i32
      %35 = tpu.assume_multiple %34, 128 : i32
      %c0_18 = arith.constant 0 : index
      %c0_19 = arith.constant 0 : index
      %36 = vector.load %arg16[%c0_18, %c0_19] : memref<128x128xf32, #tpu.memory_space<vmem>>, vector<128x128xf32>
      %c0_20 = arith.constant 0 : index
      %c0_21 = arith.constant 0 : index
      %37 = vector.load %arg5[%c0_20, %c0_21] : memref<128x1xf32, #tpu.memory_space<vmem>>, vector<128x1xf32>
      %38 = vector.broadcast %37 : vector<128x1xf32> to vector<128x128xf32>
      %39 = arith.mulf %36, %38 : vector<128x128xf32>
      %40 = arith.truncf %39 : vector<128x128xf32> to vector<128x128xbf16>
      %c2_i32_22 = arith.constant 2 : i32
      %41 = arith.cmpi slt, %arg0, %c2_i32_22 : i32
      %42 = arith.extui %41 : i1 to i32
      %c0_i32_23 = arith.constant 0 : i32
      %43 = arith.cmpi ne, %42, %c0_i32_23 : i32
      scf.if %43 {
        %c1_i32_26 = arith.constant 1 : i32
        %47 = arith.subi %c1_i32_26, %19 : i32
        %48 = arith.index_cast %47 : i32 to index
        %49 = arith.index_cast %35 : i32 to index
        %c0_27 = arith.constant 0 : index
        %50 = vector.load %arg15[%48, %49, %c0_27] : memref<2x128x128xbf16, #tpu.memory_space<vmem>>, vector<1x128x128xbf16>
        %51 = vector.shape_cast %50 : vector<1x128x128xbf16> to vector<128x128xbf16>
        %52 = vector.shape_cast %40 : vector<128x128xbf16> to vector<1x128x128xbf16>
        tpu.vector_store %arg15[%48, %49, %c0_27], %52 {strides = array<i32>} : memref<2x128x128xbf16, #tpu.memory_space<vmem>>, vector<1x128x128xbf16>,
      } else {
      }
      %c2_i32_24 = arith.constant 2 : i32
      %44 = arith.cmpi eq, %arg0, %c2_i32_24 : i32
      %45 = arith.extui %44 : i1 to i32
      %c0_i32_25 = arith.constant 0 : i32
      %46 = arith.cmpi ne, %45, %c0_i32_25 : i32
      scf.if %46 {
        %c0_26 = arith.constant 0 : index
        %c0_27 = arith.constant 0 : index
        %47 = vector.load %arg6[%c0_26, %c0_27] : memref<128x128xbf16, #tpu.memory_space<vmem>>, vector<128x128xbf16>
        %cst_28 = arith.constant dense<0.000000e+00> : vector<128x128xf32>
        %48 = tpu.matmul %40, %47, %cst_28 {dimension_numbers = #tpu.dot_dimension_numbers<[1], [0], [0], [1], [0, 0, 1, 1], [], []>} : vector<128x128xbf16>, vector<128x128xbf16>, vector<128x128xf32> -> vector<128x128xf32>
        %c0_29 = arith.constant 0 : index
        %c0_30 = arith.constant 0 : index
        %49 = vector.load %arg7[%c0_29, %c0_30] : memref<1x128xf32, #tpu.memory_space<vmem>>, vector<1x128xf32>
        %50 = vector.broadcast %49 : vector<1x128xf32> to vector<128x128xf32>
        %51 = arith.addf %48, %50 : vector<128x128xf32>
        %cst_31 = arith.constant 0.000000e+00 : f32
        %52 = vector.broadcast %cst_31 : f32 to vector<128x128xf32>
        %53 = arith.maximumf %51, %52 : vector<128x128xf32>
        %54 = arith.truncf %53 : vector<128x128xf32> to vector<128x128xbf16>
        %c0_32 = arith.constant 0 : index
        %c0_33 = arith.constant 0 : index
        %55 = vector.load %arg8[%c0_32, %c0_33] : memref<128x128xbf16, #tpu.memory_space<vmem>>, vector<128x128xbf16>
        %cst_34 = arith.constant dense<0.000000e+00> : vector<128x128xf32>
        %56 = tpu.matmul %54, %55, %cst_34 {dimension_numbers = #tpu.dot_dimension_numbers<[1], [0], [0], [1], [0, 0, 1, 1], [], []>} : vector<128x128xbf16>, vector<128x128xbf16>, vector<128x128xf32> -> vector<128x128xf32>
        %c0_35 = arith.constant 0 : index
        %c0_36 = arith.constant 0 : index
        %57 = vector.load %arg9[%c0_35, %c0_36] : memref<1x128xf32, #tpu.memory_space<vmem>>, vector<1x128xf32>
        %58 = vector.broadcast %57 : vector<1x128xf32> to vector<128x128xf32>
        %59 = arith.addf %56, %58 : vector<128x128xf32>
        %c0_37 = arith.constant 0 : index
        %c0_38 = arith.constant 0 : index
        %60 = vector.load %arg10[%c0_37, %c0_38] : memref<2x128xbf16, #tpu.memory_space<vmem>>, vector<2x128xbf16>
        %61 = arith.truncf %59 : vector<128x128xf32> to vector<128x128xbf16>
        %cst_39 = arith.constant dense<0.000000e+00> : vector<2x128xf32>
        %62 = tpu.matmul %60, %61, %cst_39 {dimension_numbers = #tpu.dot_dimension_numbers<[1], [0], [0], [1], [0, 0, 1, 1], [], []>} : vector<2x128xbf16>, vector<128x128xbf16>, vector<2x128xf32> -> vector<2x128xf32>
        %c0_i32_40 = arith.constant 0 : i32
        %63 = arith.cmpi eq, %arg1, %c0_i32_40 : i32
        %64 = arith.extui %63 : i1 to i32
        %c0_i32_41 = arith.constant 0 : i32
        %65 = arith.cmpi ne, %64, %c0_i32_41 : i32
        scf.if %65 {
          %cst_48 = arith.constant 0.000000e+00 : f32
          %72 = vector.broadcast %cst_48 : f32 to vector<2x128xf32>
          %c0_49 = arith.constant 0 : index
          %c0_50 = arith.constant 0 : index
          %73 = vector.load %arg17[%c0_49, %c0_50] : memref<2x128xf32, #tpu.memory_space<vmem>>, vector<2x128xf32>
          tpu.vector_store %arg17[%c0_49, %c0_50], %72 {strides = array<i32>} : memref<2x128xf32, #tpu.memory_space<vmem>>, vector<2x128xf32>,
        } else {
        }
        %c0_42 = arith.constant 0 : index
        %c0_43 = arith.constant 0 : index
        %66 = vector.load %arg17[%c0_42, %c0_43] : memref<2x128xf32, #tpu.memory_space<vmem>>, vector<2x128xf32>
        %67 = arith.addf %66, %62 : vector<2x128xf32>
        %c0_44 = arith.constant 0 : index
        %c0_45 = arith.constant 0 : index
        %68 = vector.load %arg17[%c0_44, %c0_45] : memref<2x128xf32, #tpu.memory_space<vmem>>, vector<2x128xf32>
        tpu.vector_store %arg17[%c0_44, %c0_45], %67 {strides = array<i32>} : memref<2x128xf32, #tpu.memory_space<vmem>>, vector<2x128xf32>,
        %c0_i32_46 = arith.constant 0 : i32
        %69 = arith.cmpi eq, %arg1, %c0_i32_46 : i32
        %70 = arith.extui %69 : i1 to i32
        %c0_i32_47 = arith.constant 0 : i32
        %71 = arith.cmpi ne, %70, %c0_i32_47 : i32
        scf.if %71 {
          %c0_48 = arith.constant 0 : index
          %c0_49 = arith.constant 0 : index
          %72 = vector.load %arg17[%c0_48, %c0_49] : memref<2x128xf32, #tpu.memory_space<vmem>>, vector<2x128xf32>
          %73 = arith.truncf %72 : vector<2x128xf32> to vector<2x128xbf16>
          %c0_50 = arith.constant 0 : index
          %c0_51 = arith.constant 0 : index
          %74 = vector.load %arg11[%c0_50, %c0_51] : memref<128x16xbf16, #tpu.memory_space<vmem>>, vector<128x16xbf16>
          %cst_52 = arith.constant dense<0.000000e+00> : vector<2x16xf32>
          %75 = tpu.matmul %73, %74, %cst_52 {dimension_numbers = #tpu.dot_dimension_numbers<[1], [0], [0], [1], [0, 0, 1, 1], [], []>} : vector<2x128xbf16>, vector<128x16xbf16>, vector<2x16xf32> -> vector<2x16xf32>
          %c0_53 = arith.constant 0 : index
          %c0_54 = arith.constant 0 : index
          %76 = vector.load %arg12[%c0_53, %c0_54] : memref<1x16xf32, #tpu.memory_space<vmem>>, vector<1x16xf32>
          %77 = vector.broadcast %76 : vector<1x16xf32> to vector<2x16xf32>
          %78 = arith.addf %75, %77 : vector<2x16xf32>
          %79 = vector.extract_strided_slice %78 {offsets = [0, 0], sizes = [2, 4], strides = [1, 1]} : vector<2x16xf32> to vector<2x4xf32>
          %c0_55 = arith.constant 0 : index
          %c0_56 = arith.constant 0 : index
          %80 = vector.load %arg13[%c0_55, %c0_56] : memref<2x4xf32, #tpu.memory_space<vmem>>, vector<2x4xf32>
          tpu.vector_store %arg13[%c0_55, %c0_56], %79 {strides = array<i32>} : memref<2x4xf32, #tpu.memory_space<vmem>>, vector<2x4xf32>,
          %81 = vector.extract_strided_slice %78 {offsets = [0, 0], sizes = [2, 4], strides = [1, 1]} : vector<2x16xf32> to vector<2x4xf32>
          %cst_57 = arith.constant dense<0xFF800000> : vector<2xf32>
          %82 = vector.multi_reduction <maximumf>, %81, %cst_57 [1] : vector<2x4xf32> to vector<2xf32>
          %83 = vector.shape_cast %82 : vector<2xf32> to vector<2x1xf32>
          %84 = vector.broadcast %83 : vector<2x1xf32> to vector<2x4xf32>
          %85 = arith.subf %81, %84 : vector<2x4xf32>
          %86 = math.exp %85 : vector<2x4xf32>
          %cst_58 = arith.constant dense<0.000000e+00> : vector<2xf32>
          %87 = vector.multi_reduction <add>, %86, %cst_58 [1] : vector<2x4xf32> to vector<2xf32>
          %88 = vector.shape_cast %87 : vector<2xf32> to vector<2x1xf32>
          %89 = vector.broadcast %88 : vector<2x1xf32> to vector<2x4xf32>
          %90 = arith.divf %86, %89 : vector<2x4xf32>
          %91 = vector.extract_strided_slice %78 {offsets = [0, 4], sizes = [2, 4], strides = [1, 1]} : vector<2x16xf32> to vector<2x4xf32>
          %cst_59 = arith.constant dense<0xFF800000> : vector<2xf32>
          %92 = vector.multi_reduction <maximumf>, %91, %cst_59 [1] : vector<2x4xf32> to vector<2xf32>
          %93 = vector.shape_cast %92 : vector<2xf32> to vector<2x1xf32>
          %94 = vector.broadcast %93 : vector<2x1xf32> to vector<2x4xf32>
          %95 = arith.subf %91, %94 : vector<2x4xf32>
          %96 = math.exp %95 : vector<2x4xf32>
          %cst_60 = arith.constant dense<0.000000e+00> : vector<2xf32>
          %97 = vector.multi_reduction <add>, %96, %cst_60 [1] : vector<2x4xf32> to vector<2xf32>
          %98 = vector.shape_cast %97 : vector<2xf32> to vector<2x1xf32>
          %99 = vector.broadcast %98 : vector<2x1xf32> to vector<2x4xf32>
          %100 = arith.divf %96, %99 : vector<2x4xf32>
          %101 = vector.extract_strided_slice %78 {offsets = [0, 8], sizes = [2, 4], strides = [1, 1]} : vector<2x16xf32> to vector<2x4xf32>
          %cst_61 = arith.constant dense<0xFF800000> : vector<2xf32>
          %102 = vector.multi_reduction <maximumf>, %101, %cst_61 [1] : vector<2x4xf32> to vector<2xf32>
          %103 = vector.shape_cast %102 : vector<2xf32> to vector<2x1xf32>
          %104 = vector.broadcast %103 : vector<2x1xf32> to vector<2x4xf32>
          %105 = arith.subf %101, %104 : vector<2x4xf32>
          %106 = math.exp %105 : vector<2x4xf32>
          %cst_62 = arith.constant dense<0.000000e+00> : vector<2xf32>
          %107 = vector.multi_reduction <add>, %106, %cst_62 [1] : vector<2x4xf32> to vector<2xf32>
          %108 = vector.shape_cast %107 : vector<2xf32> to vector<2x1xf32>
          %109 = vector.broadcast %108 : vector<2x1xf32> to vector<2x4xf32>
          %110 = arith.divf %106, %109 : vector<2x4xf32>
          %111 = vector.extract_strided_slice %78 {offsets = [0, 12], sizes = [2, 4], strides = [1, 1]} : vector<2x16xf32> to vector<2x4xf32>
          %cst_63 = arith.constant dense<0xFF800000> : vector<2xf32>
          %112 = vector.multi_reduction <maximumf>, %111, %cst_63 [1] : vector<2x4xf32> to vector<2xf32>
          %113 = vector.shape_cast %112 : vector<2xf32> to vector<2x1xf32>
          %114 = vector.broadcast %113 : vector<2x1xf32> to vector<2x4xf32>
          %115 = arith.subf %111, %114 : vector<2x4xf32>
          %116 = math.exp %115 : vector<2x4xf32>
          %cst_64 = arith.constant dense<0.000000e+00> : vector<2xf32>
          %117 = vector.multi_reduction <add>, %116, %cst_64 [1] : vector<2x4xf32> to vector<2xf32>
          %118 = vector.shape_cast %117 : vector<2xf32> to vector<2x1xf32>
          %119 = vector.broadcast %118 : vector<2x1xf32> to vector<2x4xf32>
          %120 = arith.divf %116, %119 : vector<2x4xf32>
          %cst_65 = arith.constant 0.000000e+00 : f32
          %121 = vector.broadcast %cst_65 : f32 to vector<2x4xf32>
          %122 = arith.addf %121, %90 : vector<2x4xf32>
          %123 = arith.addf %122, %100 : vector<2x4xf32>
          %124 = arith.addf %123, %110 : vector<2x4xf32>
          %125 = arith.addf %124, %120 : vector<2x4xf32>
          %cst_66 = arith.constant 4.000000e+00 : f32
          %126 = vector.broadcast %cst_66 : f32 to vector<2x4xf32>
          %127 = arith.divf %125, %126 : vector<2x4xf32>
          %128 = arith.subf %90, %127 : vector<2x4xf32>
          %129 = arith.mulf %128, %128 : vector<2x4xf32>
          %cst_67 = arith.constant dense<0.000000e+00> : vector<2xf32>
          %130 = vector.multi_reduction <add>, %129, %cst_67 [1] : vector<2x4xf32> to vector<2xf32>
          %131 = vector.shape_cast %130 : vector<2xf32> to vector<2x1xf32>
          %132 = vector.shape_cast %131 : vector<2x1xf32> to vector<1x2x1xf32>
          %cst_68 = arith.constant dense<0.000000e+00> : vector<1xf32>
          %133 = vector.multi_reduction <add>, %132, %cst_68 [1, 2] : vector<1x2x1xf32> to vector<1xf32>
          %134 = vector.shape_cast %133 : vector<1xf32> to vector<1x1x1xf32>
          %135 = vector.extract %134[0, 0, 0] : f32 from vector<1x1x1xf32>
          %136 = vector.broadcast %135 : f32 to vector<1x1xf32>
          %cst_69 = arith.constant 2.000000e+00 : f32
          %137 = vector.broadcast %cst_69 : f32 to vector<1x1xf32>
          %138 = arith.divf %136, %137 : vector<1x1xf32>
          %cst_70 = arith.constant 0.000000e+00 : f32
          %139 = vector.broadcast %cst_70 : f32 to vector<1x1xf32>
          %140 = arith.addf %139, %138 : vector<1x1xf32>
          %141 = arith.subf %100, %127 : vector<2x4xf32>
          %142 = arith.mulf %141, %141 : vector<2x4xf32>
          %cst_71 = arith.constant dense<0.000000e+00> : vector<2xf32>
          %143 = vector.multi_reduction <add>, %142, %cst_71 [1] : vector<2x4xf32> to vector<2xf32>
          %144 = vector.shape_cast %143 : vector<2xf32> to vector<2x1xf32>
          %145 = vector.shape_cast %144 : vector<2x1xf32> to vector<1x2x1xf32>
          %cst_72 = arith.constant dense<0.000000e+00> : vector<1xf32>
          %146 = vector.multi_reduction <add>, %145, %cst_72 [1, 2] : vector<1x2x1xf32> to vector<1xf32>
          %147 = vector.shape_cast %146 : vector<1xf32> to vector<1x1x1xf32>
          %148 = vector.extract %147[0, 0, 0] : f32 from vector<1x1x1xf32>
          %149 = vector.broadcast %148 : f32 to vector<1x1xf32>
          %cst_73 = arith.constant 2.000000e+00 : f32
          %150 = vector.broadcast %cst_73 : f32 to vector<1x1xf32>
          %151 = arith.divf %149, %150 : vector<1x1xf32>
          %152 = arith.addf %140, %151 : vector<1x1xf32>
          %153 = arith.subf %110, %127 : vector<2x4xf32>
          %154 = arith.mulf %153, %153 : vector<2x4xf32>
          %cst_74 = arith.constant dense<0.000000e+00> : vector<2xf32>
          %155 = vector.multi_reduction <add>, %154, %cst_74 [1] : vector<2x4xf32> to vector<2xf32>
          %156 = vector.shape_cast %155 : vector<2xf32> to vector<2x1xf32>
          %157 = vector.shape_cast %156 : vector<2x1xf32> to vector<1x2x1xf32>
          %cst_75 = arith.constant dense<0.000000e+00> : vector<1xf32>
          %158 = vector.multi_reduction <add>, %157, %cst_75 [1, 2] : vector<1x2x1xf32> to vector<1xf32>
          %159 = vector.shape_cast %158 : vector<1xf32> to vector<1x1x1xf32>
          %160 = vector.extract %159[0, 0, 0] : f32 from vector<1x1x1xf32>
          %161 = vector.broadcast %160 : f32 to vector<1x1xf32>
          %cst_76 = arith.constant 2.000000e+00 : f32
          %162 = vector.broadcast %cst_76 : f32 to vector<1x1xf32>
          %163 = arith.divf %161, %162 : vector<1x1xf32>
          %164 = arith.addf %152, %163 : vector<1x1xf32>
          %165 = arith.subf %120, %127 : vector<2x4xf32>
          %166 = arith.mulf %165, %165 : vector<2x4xf32>
          %cst_77 = arith.constant dense<0.000000e+00> : vector<2xf32>
          %167 = vector.multi_reduction <add>, %166, %cst_77 [1] : vector<2x4xf32> to vector<2xf32>
          %168 = vector.shape_cast %167 : vector<2xf32> to vector<2x1xf32>
          %169 = vector.shape_cast %168 : vector<2x1xf32> to vector<1x2x1xf32>
          %cst_78 = arith.constant dense<0.000000e+00> : vector<1xf32>
          %170 = vector.multi_reduction <add>, %169, %cst_78 [1, 2] : vector<1x2x1xf32> to vector<1xf32>
          %171 = vector.shape_cast %170 : vector<1xf32> to vector<1x1x1xf32>
          %172 = vector.extract %171[0, 0, 0] : f32 from vector<1x1x1xf32>
          %173 = vector.broadcast %172 : f32 to vector<1x1xf32>
          %cst_79 = arith.constant 2.000000e+00 : f32
          %174 = vector.broadcast %cst_79 : f32 to vector<1x1xf32>
          %175 = arith.divf %173, %174 : vector<1x1xf32>
          %176 = arith.addf %164, %175 : vector<1x1xf32>
          %cst_80 = arith.constant 4.000000e+00 : f32
          %177 = vector.broadcast %cst_80 : f32 to vector<1x1xf32>
          %178 = arith.divf %176, %177 : vector<1x1xf32>
          %cst_81 = arith.constant 9.99999993E-9 : f32
          %179 = vector.broadcast %cst_81 : f32 to vector<2x4xf32>
          %180 = arith.addf %127, %179 : vector<2x4xf32>
          %181 = math.log %180 : vector<2x4xf32>
          %182 = arith.mulf %127, %181 : vector<2x4xf32>
          %cst_82 = arith.constant dense<0.000000e+00> : vector<2xf32>
          %183 = vector.multi_reduction <add>, %182, %cst_82 [1] : vector<2x4xf32> to vector<2xf32>
          %184 = vector.shape_cast %183 : vector<2xf32> to vector<2x1xf32>
          %185 = vector.shape_cast %184 : vector<2x1xf32> to vector<1x2x1xf32>
          %cst_83 = arith.constant dense<0.000000e+00> : vector<1xf32>
          %186 = vector.multi_reduction <add>, %185, %cst_83 [1, 2] : vector<1x2x1xf32> to vector<1xf32>
          %187 = vector.shape_cast %186 : vector<1xf32> to vector<1x1x1xf32>
          %188 = vector.extract %187[0, 0, 0] : f32 from vector<1x1x1xf32>
          %189 = vector.broadcast %188 : f32 to vector<1x1xf32>
          %cst_84 = arith.constant 2.000000e+00 : f32
          %190 = vector.broadcast %cst_84 : f32 to vector<1x1xf32>
          %191 = arith.divf %189, %190 : vector<1x1xf32>
          %cst_85 = arith.constant 0.000000e+00 : f32
          %192 = vector.broadcast %cst_85 : f32 to vector<1x1xf32>
          %193 = arith.subf %192, %191 : vector<1x1xf32>
          %cst_86 = arith.constant 1.000000e+00 : f32
          %194 = vector.broadcast %cst_86 : f32 to vector<1x1xf32>
          %195 = arith.mulf %194, %178 : vector<1x1xf32>
          %196 = arith.addf %195, %193 : vector<1x1xf32>
          %c0_87 = arith.constant 0 : index
          %c0_88 = arith.constant 0 : index
          %197 = vector.load %arg14[%c0_87, %c0_88] : memref<1x1xf32, #tpu.memory_space<vmem>>, vector<1x1xf32>
          tpu.vector_store %arg14[%c0_87, %c0_88], %196 {strides = array<i32>} : memref<1x1xf32, #tpu.memory_space<vmem>>, vector<1x1xf32>,
        } else {
        }
      } else {
      }
    } else {
    }
    return
  }
  func.func @transform_1(%arg0: i32, %arg1: i32, %arg2: i32) -> (i32, i32) {
    %c0_i32 = arith.constant 0 : i32
    return %arg1, %arg2 : i32, i32
  }
  func.func @transform_2(%arg0: i32, %arg1: i32, %arg2: i32) -> (i32, i32) {
    %c0_i32 = arith.constant 0 : i32
    %c0_i32_0 = arith.constant 0 : i32
    return %arg1, %c0_i32 : i32, i32
  }
  func.func @transform_3(%arg0: i32, %arg1: i32, %arg2: i32) -> (i32, i32) {
    %c0_i32 = arith.constant 0 : i32
    %c0_i32_0 = arith.constant 0 : i32
    %c0_i32_1 = arith.constant 0 : i32
    return %c0_i32, %c0_i32_0 : i32, i32
  }
  func.func @transform_4(%arg0: i32, %arg1: i32, %arg2: i32) -> (i32, i32) {
    %c0_i32 = arith.constant 0 : i32
    %c0_i32_0 = arith.constant 0 : i32
    %c0_i32_1 = arith.constant 0 : i32
    return %c0_i32, %c0_i32_0 : i32, i32
  }
  func.func @transform_5(%arg0: i32, %arg1: i32, %arg2: i32) -> (i32, i32) {
    %c0_i32 = arith.constant 0 : i32
    %c0_i32_0 = arith.constant 0 : i32
    %c0_i32_1 = arith.constant 0 : i32
    return %c0_i32, %c0_i32_0 : i32, i32
  }
  func.func @transform_6(%arg0: i32, %arg1: i32, %arg2: i32) -> (i32, i32) {
    %c0_i32 = arith.constant 0 : i32
    %c0_i32_0 = arith.constant 0 : i32
    %c0_i32_1 = arith.constant 0 : i32
    return %c0_i32, %c0_i32_0 : i32, i32
  }
  func.func @transform_7(%arg0: i32, %arg1: i32, %arg2: i32) -> (i32, i32) {
    %c0_i32 = arith.constant 0 : i32
    %c0_i32_0 = arith.constant 0 : i32
    return %c0_i32, %arg1 : i32, i32
  }
  func.func @transform_8(%arg0: i32, %arg1: i32, %arg2: i32) -> (i32, i32) {
    %c0_i32 = arith.constant 0 : i32
    %c0_i32_0 = arith.constant 0 : i32
    %c0_i32_1 = arith.constant 0 : i32
    return %c0_i32, %c0_i32_0 : i32, i32
  }
  func.func @transform_9(%arg0: i32, %arg1: i32, %arg2: i32) -> (i32, i32) {
    %c0_i32 = arith.constant 0 : i32
    %c0_i32_0 = arith.constant 0 : i32
    %c0_i32_1 = arith.constant 0 : i32
    return %c0_i32, %c0_i32_0 : i32, i32
  }
  func.func @transform_10(%arg0: i32, %arg1: i32, %arg2: i32) -> (i32, i32) {
    %c0_i32 = arith.constant 0 : i32
    %c0_i32_0 = arith.constant 0 : i32
    %c0_i32_1 = arith.constant 0 : i32
    return %c0_i32, %c0_i32_0 : i32, i32
  }
  func.func @transform_11(%arg0: i32, %arg1: i32, %arg2: i32) -> (i32, i32) {
    %c0_i32 = arith.constant 0 : i32
    %c0_i32_0 = arith.constant 0 : i32
    %c0_i32_1 = arith.constant 0 : i32
    return %c0_i32, %c0_i32_0 : i32, i32
  }
}

</mosaic_0001>

<llo_original>
// kernel: tpu_custom_call.1
$region0: #{tpu_custom_call.1}
  #allocation0 [shape = 'u32[]', space=smem, size = 0x4, offset = 0x4, fixed_abs, tag = 'smem constant byte address 0x4 - core index']
  #allocation1 [shape = 'u32[144,128]{1,0:T(1,128)}', space=vmem, size = 0x12000, scoped, tag = 'internal scratch']
  #allocation2 [shape = 'bf16[2,128,128]{2,1,0:T(8,128)(2,1)}', space=vmem, size = 0x10000, scoped, tag = 'scratch operand']
  #allocation3 [shape = 'f32[128,128]{1,0:T(8,128)}', space=vmem, size = 0x10000, scoped, tag = 'scratch operand']
  #allocation4 [shape = 'f32[2,128]{1,0:T(2,128)}', space=vmem, size = 0x400, scoped, tag = 'scratch operand']
  #allocation12 [shape = 's32[]', space=sflag, size = 0x4, offset = 0, fixed_abs, tag = 'sflag constant byte address 0x0 - dummy sync flag']
  %s0 = inlined_call_operand.vmem [shape: bf16[128,128], index: 0, kind: input, shape index: {}]
  %s1 = inlined_call_operand.vmem [shape: bf16[128,128], index: 1, kind: input, shape index: {}]
  %s2 = inlined_call_operand.vmem [shape: f32[128,1], index: 2, kind: input, shape index: {}]
  %s3 = inlined_call_operand.vmem [shape: bf16[128,128], index: 3, kind: input, shape index: {}]
  %s4 = inlined_call_operand.vmem [shape: f32[1,128], index: 4, kind: input, shape index: {}]
  %s5 = inlined_call_operand.hbm [shape: bf16[128,128], index: 5, kind: input, shape index: {}]
  %s6 = inlined_call_operand.vmem [shape: f32[1,128], index: 6, kind: input, shape index: {}]
  %s7 = inlined_call_operand.vmem [shape: bf16[2,128], index: 7, kind: input, shape index: {}]
  %s8 = inlined_call_operand.vmem [shape: bf16[128,16], index: 8, kind: input, shape index: {}]
  %s9 = inlined_call_operand.vmem [shape: f32[1,16], index: 9, kind: input, shape index: {}]
  %s10 = inlined_call_operand.hbm [shape: f32[2,4], index: 10, kind: output, shape index: {0}]
  %s11 = inlined_call_operand.hbm [shape: f32[1,1], index: 11, kind: output, shape index: {1}]
  %12 = xla_tuple %s10, %s11
  %s13 = sld [smem:[#allocation0]]
  $region144: #{tpu_custom_call.1} parent=0
    _
  %s15 = ssub.s32 1, %s13
  %s16 = scalar_select 0, %s15, %s13
  $region1: #{tpu_custom_call.1} parent=0
    #allocation5 [shape = 'u8[32768]{0}', space=vmem, size = 0x8000, scoped, tag = 'input window, operand 5, single buffered']
    #allocation6 [shape = 's32[2]{0}', space=sflag, size = 0x8, scoped, tag = 'scoped memory for tpu_custom_call.1']
    #allocation7 [shape = 's32[2]{0}', space=sflag, size = 0x8, scoped, tag = 'scoped memory for tpu_custom_call.1']
    #allocation8 [shape = 'u8[1024]{0}', space=vmem, size = 0x400, scoped, tag = 'output window, operand 0, single buffered']
    #allocation9 [shape = 'u8[512]{0}', space=vmem, size = 0x400, scoped, tag = 'output window, operand 1, single buffered']
    #allocation10 [shape = 's32[1]{0}', space=sflag, size = 0x4, scoped, tag = 'scoped memory for tpu_custom_call.1']
    %17 = vsyncpa [#allocation6], 0
    %18 = vsyncpa [#allocation7], 0
    %19 = vsyncpa [#allocation10], 0
    loop: start=0, step=1, limit=5
    $region2: #{tpu_custom_call.1} parent=1 // loop_pre_header
      _
    $region3: #{tpu_custom_call.1} parent=1 // loop_header
      %s21 = sphi 0, %s25
      %p22 = scmp.ge.s32.totalorder %s21, 5
      %s28 = sphi 0, %s47
      %s29 = sphi 0, %s43
      %s30 = sphi 0, %s39
      %s31 = sphi 0, %s28
      %s32 = sphi 0, %s29
      %s33 = sphi 0, %s30
      %s34 = sphi 0, %s31
      %s35 = sphi 0, %s32
      %s36 = sphi 0, %s33
      %s52 = sphi 0, %s54
      %s55 = sphi 0, %s52
      %s56 = sphi 0, %s55
      %s72 = sphi 0, %s56
      %s78 = sphi 0, %s80
      %s81 = sphi 0, %s78
      %s82 = sphi 0, %s81
      %s98 = sphi 0, %s82
      %s102 = sphi 0, %s102
      %s104 = sphi 0, %s102
      %s105 = sphi 0, %s104
      %s119 = sphi 0, %s105
      %s123 = sphi 0, %s123
      %s125 = sphi 0, %s123
      %s126 = sphi 0, %s125
      %s140 = sphi 0, %s126
      %s144 = sphi 0, %s144
      %s146 = sphi 0, %s144
      %s147 = sphi 0, %s146
      %s161 = sphi 0, %s147
      %s165 = sphi 0, %s165
      %s167 = sphi 0, %s165
      %s168 = sphi 0, %s167
      %s182 = sphi 0, %s168
      %s188 = sphi 0, %s190
      %s191 = sphi 0, %s188
      %s192 = sphi 0, %s191
      %s208 = sphi 0, %s192
      %s212 = sphi 0, %s212
      %s214 = sphi 0, %s212
      %s215 = sphi 0, %s214
      %s229 = sphi 0, %s215
      %s233 = sphi 0, %s233
      %s235 = sphi 0, %s233
      %s236 = sphi 0, %s235
      %s250 = sphi 0, %s236
      %s254 = sphi 0, %s254
      %s256 = sphi 0, %s254
      %s257 = sphi 0, %s256
      %s271 = sphi 0, %s257
      %s275 = sphi 0, %s275
      %s277 = sphi 0, %s275
      %s278 = sphi 0, %s277
      %s292 = sphi 0, %s278
    $region4: #{tpu_custom_call.1} parent=1 // loop_header_branch
      %24 = sbr.rel (%p22) target = $region8
    $region5: #{tpu_custom_call.1} parent=1 // loop_body
      %s26 = ssub.s32 %s21, 1
      %s27 = ssub.s32 %s21, 2
      %s37 = sadd.s32 1, %s30
      %p38 = scmp.ge.s32.totalorder %s37, 1
      %s39 = scalar_select %p38, 0, %s37
      %s40 = sadd.s32 1, %s29
      %s41 = scalar_select %p38, %s40, %s29
      %p42 = scmp.ge.s32.totalorder %s41, 1
      %s43 = scalar_select %p42, 0, %s41
      %s44 = sadd.s32 1, %s28
      %s45 = scalar_select %p42, %s44, %s28
      %p46 = scmp.ge.s32.totalorder %s45, 3
      %s47 = scalar_select %p46, 0, %s45
      %s48 = ssub.s32 %s29, %s43
      %s49 = ssub.s32 %s30, %s39
      %s50 = sor.u32 %s48, %s49
      %p51 = scmp.eq.s32.totalorder %s50, 0
      %s53 = sadd.s32 %s52, 1
      %s54 = scalar_select %p51, %s52, %s53
      %p57 = pneg %p51
      %p58 = scmp.eq.s32.totalorder %s21, 2
      %p59 = por %p57, %p58
      %p60 = scmp.ne.s32.totalorder %s52, %s55
      %p61 = scmp.eq.s32.totalorder %s21, 0
      %p62 = por %p60, %p61
      %p63 = scmp.ne.s32.totalorder %s52, %s55
      %p64 = scmp.eq.s32.totalorder %s26, 2
      %p65 = por %p63, %p64
      %p66 = scmp.ne.s32.totalorder %s55, %s56
      %p67 = scmp.eq.s32.totalorder %s26, 0
      %p68 = por %p66, %p67
      %p69 = scmp.ne.s32.totalorder %s55, %s56
      %p70 = scmp.eq.s32.totalorder %s27, 2
      %p71 = por %p69, %p70
      %p73 = scmp.ne.s32.totalorder %s56, %s72
      %p74 = scmp.eq.s32.totalorder %s27, 0
      %p75 = por %p73, %p74
      %s76 = ssub.s32 %s29, %s43
      %p77 = scmp.eq.s32.totalorder %s76, 0
      %s79 = sadd.s32 %s78, 1
      %s80 = scalar_select %p77, %s78, %s79
      %p83 = pneg %p77
      %p84 = scmp.eq.s32.totalorder %s21, 2
      %p85 = por %p83, %p84
      %p86 = scmp.ne.s32.totalorder %s78, %s81
      %p87 = scmp.eq.s32.totalorder %s21, 0
      %p88 = por %p86, %p87
      %p89 = scmp.ne.s32.totalorder %s78, %s81
      %p90 = scmp.eq.s32.totalorder %s26, 2
      %p91 = por %p89, %p90
      %p92 = scmp.ne.s32.totalorder %s81, %s82
      %p93 = scmp.eq.s32.totalorder %s26, 0
      %p94 = por %p92, %p93
      %p95 = scmp.ne.s32.totalorder %s81, %s82
      %p96 = scmp.eq.s32.totalorder %s27, 2
      %p97 = por %p95, %p96
      %p99 = scmp.ne.s32.totalorder %s82, %s98
      %p100 = scmp.eq.s32.totalorder %s27, 0
      %p101 = por %p99, %p100
      %s103 = sadd.s32 %s102, 1
      %p106 = scmp.eq.s32.totalorder %s21, 2
      %p107 = scmp.ne.s32.totalorder %s102, %s104
      %p108 = scmp.eq.s32.totalorder %s21, 0
      %p109 = por %p107, %p108
      %p110 = scmp.ne.s32.totalorder %s102, %s104
      %p111 = scmp.eq.s32.totalorder %s26, 2
      %p112 = por %p110, %p111
      %p113 = scmp.ne.s32.totalorder %s104, %s105
      %p114 = scmp.eq.s32.totalorder %s26, 0
      %p115 = por %p113, %p114
      %p116 = scmp.ne.s32.totalorder %s104, %s105
      %p117 = scmp.eq.s32.totalorder %s27, 2
      %p118 = por %p116, %p117
      %p120 = scmp.ne.s32.totalorder %s105, %s119
      %p121 = scmp.eq.s32.totalorder %s27, 0
      %p122 = por %p120, %p121
      %s124 = sadd.s32 %s123, 1
      %p127 = scmp.eq.s32.totalorder %s21, 2
      %p128 = scmp.ne.s32.totalorder %s123, %s125
      %p129 = scmp.eq.s32.totalorder %s21, 0
      %p130 = por %p128, %p129
      %p131 = scmp.ne.s32.totalorder %s123, %s125
      %p132 = scmp.eq.s32.totalorder %s26, 2
      %p133 = por %p131, %p132
      %p134 = scmp.ne.s32.totalorder %s125, %s126
      %p135 = scmp.eq.s32.totalorder %s26, 0
      %p136 = por %p134, %p135
      %p137 = scmp.ne.s32.totalorder %s125, %s126
      %p138 = scmp.eq.s32.totalorder %s27, 2
      %p139 = por %p137, %p138
      %p141 = scmp.ne.s32.totalorder %s126, %s140
      %p142 = scmp.eq.s32.totalorder %s27, 0
      %p143 = por %p141, %p142
      %s145 = sadd.s32 %s144, 1
      %p148 = scmp.eq.s32.totalorder %s21, 2
      %p149 = scmp.ne.s32.totalorder %s144, %s146
      %p150 = scmp.eq.s32.totalorder %s21, 0
      %p151 = por %p149, %p150
      %p152 = scmp.ne.s32.totalorder %s144, %s146
      %p153 = scmp.eq.s32.totalorder %s26, 2
      %p154 = por %p152, %p153
      %p155 = scmp.ne.s32.totalorder %s146, %s147
      %p156 = scmp.eq.s32.totalorder %s26, 0
      %p157 = por %p155, %p156
      %p158 = scmp.ne.s32.totalorder %s146, %s147
      %p159 = scmp.eq.s32.totalorder %s27, 2
      %p160 = por %p158, %p159
      %p162 = scmp.ne.s32.totalorder %s147, %s161
      %p163 = scmp.eq.s32.totalorder %s27, 0
      %p164 = por %p162, %p163
      %s166 = sadd.s32 %s165, 1
      %p169 = scmp.eq.s32.totalorder %s21, 2
      %p170 = scmp.ne.s32.totalorder %s165, %s167
      %p171 = scmp.eq.s32.totalorder %s21, 0
      %p172 = por %p170, %p171
      %p173 = scmp.ne.s32.totalorder %s165, %s167
      %p174 = scmp.eq.s32.totalorder %s26, 2
      %p175 = por %p173, %p174
      %p176 = scmp.ne.s32.totalorder %s167, %s168
      %p177 = scmp.eq.s32.totalorder %s26, 0
      %p178 = por %p176, %p177
      %p179 = scmp.ne.s32.totalorder %s167, %s168
      %p180 = scmp.eq.s32.totalorder %s27, 2
      %p181 = por %p179, %p180
      %p183 = scmp.ne.s32.totalorder %s168, %s182
      %p184 = scmp.eq.s32.totalorder %s27, 0
      %p185 = por %p183, %p184
      %s186 = ssub.s32 %s29, %s43
      %p187 = scmp.eq.s32.totalorder %s186, 0
      %s189 = sadd.s32 %s188, 1
      %s190 = scalar_select %p187, %s188, %s189
      %p193 = pneg %p187
      %p194 = scmp.eq.s32.totalorder %s21, 2
      %p195 = por %p193, %p194
      %p196 = scmp.ne.s32.totalorder %s188, %s191
      %p197 = scmp.eq.s32.totalorder %s21, 0
      %p198 = por %p196, %p197
      %p199 = scmp.ne.s32.totalorder %s188, %s191
      %p200 = scmp.eq.s32.totalorder %s26, 2
      %p201 = por %p199, %p200
      %p202 = scmp.ne.s32.totalorder %s191, %s192
      %p203 = scmp.eq.s32.totalorder %s26, 0
      %p204 = por %p202, %p203
      %p205 = scmp.ne.s32.totalorder %s191, %s192
      %p206 = scmp.eq.s32.totalorder %s27, 2
      %p207 = por %p205, %p206
      %p209 = scmp.ne.s32.totalorder %s192, %s208
      %p210 = scmp.eq.s32.totalorder %s27, 0
      %p211 = por %p209, %p210
      %s213 = sadd.s32 %s212, 1
      %p216 = scmp.eq.s32.totalorder %s21, 2
      %p217 = scmp.ne.s32.totalorder %s212, %s214
      %p218 = scmp.eq.s32.totalorder %s21, 0
      %p219 = por %p217, %p218
      %p220 = scmp.ne.s32.totalorder %s212, %s214
      %p221 = scmp.eq.s32.totalorder %s26, 2
      %p222 = por %p220, %p221
      %p223 = scmp.ne.s32.totalorder %s214, %s215
      %p224 = scmp.eq.s32.totalorder %s26, 0
      %p225 = por %p223, %p224
      %p226 = scmp.ne.s32.totalorder %s214, %s215
      %p227 = scmp.eq.s32.totalorder %s27, 2
      %p228 = por %p226, %p227
      %p230 = scmp.ne.s32.totalorder %s215, %s229
      %p231 = scmp.eq.s32.totalorder %s27, 0
      %p232 = por %p230, %p231
      %s234 = sadd.s32 %s233, 1
      %p237 = scmp.eq.s32.totalorder %s21, 2
      %p238 = scmp.ne.s32.totalorder %s233, %s235
      %p239 = scmp.eq.s32.totalorder %s21, 0
      %p240 = por %p238, %p239
      %p241 = scmp.ne.s32.totalorder %s233, %s235
      %p242 = scmp.eq.s32.totalorder %s26, 2
      %p243 = por %p241, %p242
      %p244 = scmp.ne.s32.totalorder %s235, %s236
      %p245 = scmp.eq.s32.totalorder %s26, 0
      %p246 = por %p244, %p245
      %p247 = scmp.ne.s32.totalorder %s235, %s236
      %p248 = scmp.eq.s32.totalorder %s27, 2
      %p249 = por %p247, %p248
      %p251 = scmp.ne.s32.totalorder %s236, %s250
      %p252 = scmp.eq.s32.totalorder %s27, 0
      %p253 = por %p251, %p252
      %s255 = sadd.s32 %s254, 1
      %p258 = scmp.eq.s32.totalorder %s21, 2
      %p259 = scmp.ne.s32.totalorder %s254, %s256
      %p260 = scmp.eq.s32.totalorder %s21, 0
      %p261 = por %p259, %p260
      %p262 = scmp.ne.s32.totalorder %s254, %s256
      %p263 = scmp.eq.s32.totalorder %s26, 2
      %p264 = por %p262, %p263
      %p265 = scmp.ne.s32.totalorder %s256, %s257
      %p266 = scmp.eq.s32.totalorder %s26, 0
      %p267 = por %p265, %p266
      %p268 = scmp.ne.s32.totalorder %s256, %s257
      %p269 = scmp.eq.s32.totalorder %s27, 2
      %p270 = por %p268, %p269
      %p272 = scmp.ne.s32.totalorder %s257, %s271
      %p273 = scmp.eq.s32.totalorder %s27, 0
      %p274 = por %p272, %p273
      %s276 = sadd.s32 %s275, 1
      %p279 = scmp.eq.s32.totalorder %s21, 2
      %p280 = scmp.ne.s32.totalorder %s275, %s277
      %p281 = scmp.eq.s32.totalorder %s21, 0
      %p282 = por %p280, %p281
      %p283 = scmp.ne.s32.totalorder %s275, %s277
      %p284 = scmp.eq.s32.totalorder %s26, 2
      %p285 = por %p283, %p284
      %p286 = scmp.ne.s32.totalorder %s277, %s278
      %p287 = scmp.eq.s32.totalorder %s26, 0
      %p288 = por %p286, %p287
      %p289 = scmp.ne.s32.totalorder %s277, %s278
      %p290 = scmp.eq.s32.totalorder %s27, 2
      %p291 = por %p289, %p290
      %p293 = scmp.ne.s32.totalorder %s278, %s292
      %p294 = scmp.eq.s32.totalorder %s27, 0
      %p295 = por %p293, %p294
      %p296 = scmp.le.s32.totalorder 1, %s21
      %p297 = scmp.lt.s32.totalorder %s21, 4
      %p298 = pnand %p296, %p297
      %p299 = pneg %p298
      // Predicated region
      $region9: #{tpu_custom_call.1} parent=5 // pred_check
        _
      $region10: #{tpu_custom_call.1} parent=5 // pred_check_branch
        %301 = sbr.rel (%p298) target = $region12
      $region11: #{tpu_custom_call.1} parent=5 // pred_region
        %s302 = ssub.s32 %s21, 1
        // Predicated region
        $region13: #{tpu_custom_call.1} parent=11 // pred_check
          %p303 = pneg %p68
        $region14: #{tpu_custom_call.1} parent=11 // pred_check_branch
          %305 = sbr.rel (%p303) target = $region16
        $region15: #{tpu_custom_call.1} parent=11 // pred_region
          %s306 = smul.u32 16, %s32
          %p307 = scmp.lt.s32.totalorder %s306, 15
          %s308 = scalar_select %p307, %s306, 15
          %p309 = scmp.lt.s32.totalorder %s33, 0
          %s310 = scalar_select %p309, %s33, 0
          %s311 = sadd.s32 %s310, %s308
          %s312 = smul.addr %s311, 4
          %s313 = scalar_lea.vmem %s1, %s312
          %s314 = smul.u32 16, %s32
        $region16: #{tpu_custom_call.1} parent=11 // pred_fallthru
          _
        // Predicated region
        $region17: #{tpu_custom_call.1} parent=11 // pred_check
          %p315 = pneg %p94
        $region18: #{tpu_custom_call.1} parent=11 // pred_check_branch
          %317 = sbr.rel (%p315) target = $region20
        $region19: #{tpu_custom_call.1} parent=11 // pred_region
          %s318 = smul.u32 16, %s32
          %p319 = scmp.lt.s32.totalorder %s318, 15
          %s320 = scalar_select %p319, %s318, 15
          %s321 = smul.addr %s320, 8
          %s322 = scalar_lea.vmem %s2, %s321
          %s323 = smul.u32 16, %s32
        $region20: #{tpu_custom_call.1} parent=11 // pred_fallthru
          _
        // Predicated region
        $region21: #{tpu_custom_call.1} parent=11 // pred_check
          %p324 = pneg %p115
        $region22: #{tpu_custom_call.1} parent=11 // pred_check_branch
          %326 = sbr.rel (%p324) target = $region24
        $region23: #{tpu_custom_call.1} parent=11 // pred_region
          _
        $region24: #{tpu_custom_call.1} parent=11 // pred_fallthru
          _
        // Predicated region
        $region25: #{tpu_custom_call.1} parent=11 // pred_check
          %p327 = pneg %p136
        $region26: #{tpu_custom_call.1} parent=11 // pred_check_branch
          %329 = sbr.rel (%p327) target = $region28
        $region27: #{tpu_custom_call.1} parent=11 // pred_region
          _
        $region28: #{tpu_custom_call.1} parent=11 // pred_fallthru
          _
        // Predicated region
        $region29: #{tpu_custom_call.1} parent=11 // pred_check
          %p330 = pneg %p157
        $region30: #{tpu_custom_call.1} parent=11 // pred_check_branch
          %332 = sbr.rel (%p330) target = $region32
        $region31: #{tpu_custom_call.1} parent=11 // pred_region
          %s334 = ssub.s32 1024, 1024
          %335 = vsyncadd [#allocation6], %s334
          %s336 = sshll.u32 [#allocation5], 4
          %s337 = int_to_ptr.vmem [resolvable:$true] %s336
          %342 = dma.hbm_to_vmem [thread:$0]  %s5, 1024, %s337, [#allocation6], 64, 64, 4
        $region32: #{tpu_custom_call.1} parent=11 // pred_fallthru
          _
        // Predicated region
        $region33: #{tpu_custom_call.1} parent=11 // pred_check
          %p343 = pneg %p178
        $region34: #{tpu_custom_call.1} parent=11 // pred_check_branch
          %345 = sbr.rel (%p343) target = $region36
        $region35: #{tpu_custom_call.1} parent=11 // pred_region
          _
        $region36: #{tpu_custom_call.1} parent=11 // pred_fallthru
          _
        // Predicated region
        $region37: #{tpu_custom_call.1} parent=11 // pred_check
          %p346 = pneg %p204
        $region38: #{tpu_custom_call.1} parent=11 // pred_check_branch
          %348 = sbr.rel (%p346) target = $region40
        $region39: #{tpu_custom_call.1} parent=11 // pred_region
          %p349 = scmp.lt.s32.totalorder %s32, 0
          %s350 = scalar_select %p349, %s32, 0
          %s351 = scalar_lea.vmem %s7, %s350
        $region40: #{tpu_custom_call.1} parent=11 // pred_fallthru
          _
        // Predicated region
        $region41: #{tpu_custom_call.1} parent=11 // pred_check
          %p352 = pneg %p225
        $region42: #{tpu_custom_call.1} parent=11 // pred_check_branch
          %354 = sbr.rel (%p352) target = $region44
        $region43: #{tpu_custom_call.1} parent=11 // pred_region
          _
        $region44: #{tpu_custom_call.1} parent=11 // pred_fallthru
          _
        // Predicated region
        $region45: #{tpu_custom_call.1} parent=11 // pred_check
          %p355 = pneg %p246
        $region46: #{tpu_custom_call.1} parent=11 // pred_check_branch
          %357 = sbr.rel (%p355) target = $region48
        $region47: #{tpu_custom_call.1} parent=11 // pred_region
          _
        $region48: #{tpu_custom_call.1} parent=11 // pred_fallthru
          _
      $region12: #{tpu_custom_call.1} parent=5 // pred_fallthru
        _
      %p358 = scmp.lt.s32.totalorder %s21, 3
      // Predicated region
      $region49: #{tpu_custom_call.1} parent=5 // pred_check
        %p359 = pneg %p358
      $region50: #{tpu_custom_call.1} parent=5 // pred_check_branch
        %361 = sbr.rel (%p359) target = $region52
      $region51: #{tpu_custom_call.1} parent=5 // pred_region
        _
      $region52: #{tpu_custom_call.1} parent=5 // pred_fallthru
        _
      %p362 = scmp.le.s32.totalorder 1, %s21
      %p363 = scmp.lt.s32.totalorder %s21, 4
      %p364 = pnand %p362, %p363
      %p365 = pneg %p364
      // Predicated region
      $region53: #{tpu_custom_call.1} parent=5 // pred_check
        _
      $region54: #{tpu_custom_call.1} parent=5 // pred_check_branch
        %367 = sbr.rel (%p364) target = $region56
      $region55: #{tpu_custom_call.1} parent=5 // pred_region
        %s368 = ssub.s32 %s21, 1
        // Predicated region
        $region57: #{tpu_custom_call.1} parent=55 // pred_check
          %p369 = pneg %p157
        $region58: #{tpu_custom_call.1} parent=55 // pred_check_branch
          %371 = sbr.rel (%p369) target = $region60
        $region59: #{tpu_custom_call.1} parent=55 // pred_region
          %372 = dma.done [#allocation6], 1024
        $region60: #{tpu_custom_call.1} parent=55 // pred_fallthru
          _
        %s373 = smul.u32 16, %s32
        %p374 = scmp.lt.s32.totalorder %s373, 15
        %s375 = scalar_select %p374, %s373, 15
        %p376 = scmp.lt.s32.totalorder %s33, 0
        %s377 = scalar_select %p376, %s33, 0
        %s378 = sadd.s32 %s377, %s375
        %s379 = smul.addr %s378, 4
        %s380 = scalar_lea.vmem %s1, %s379
        %p381 = pneg %p68
        %p382 = pneg %p65
        %s383 = smul.u32 16, %s32
        %p384 = scmp.lt.s32.totalorder %s383, 15
        %s385 = scalar_select %p384, %s383, 15
        %s386 = smul.addr %s385, 8
        %s387 = scalar_lea.vmem %s2, %s386
        %p388 = pneg %p94
        %p389 = pneg %p91
        %p390 = pneg %p115
        %p391 = pneg %p112
        %p392 = pneg %p136
        %p393 = pneg %p133
        %p394 = pneg %p157
        %p395 = pneg %p154
        %p396 = pneg %p178
        %p397 = pneg %p175
        %p398 = scmp.lt.s32.totalorder %s32, 0
        %s399 = scalar_select %p398, %s32, 0
        %s400 = scalar_lea.vmem %s7, %s399
        %p401 = pneg %p204
        %p402 = pneg %p201
        %p403 = pneg %p225
        %p404 = pneg %p222
        %p405 = pneg %p246
        %p406 = pneg %p243
        %p407 = pneg %p267
        %p408 = pneg %p264
        %p409 = pneg %p288
        %p410 = pneg %p285
        %s411 = smul.u32 16, %s32
        %p412 = scmp.lt.s32.totalorder %s411, 15
        %s413 = scalar_select %p412, %s411, 15
        %p414 = scmp.lt.s32.totalorder %s33, 0
        %s415 = scalar_select %p414, %s33, 0
        %s416 = sadd.s32 %s415, %s413
        %s417 = smul.addr %s416, 4
        %s418 = scalar_lea.vmem %s1, %s417
        %s419 = smul.u32 16, %s32
        %s420 = smul.u32 16, %s32
        %p421 = scmp.lt.s32.totalorder %s420, 15
        %s422 = scalar_select %p421, %s420, 15
        %s423 = smul.addr %s422, 8
        %s424 = scalar_lea.vmem %s2, %s423
        %s425 = smul.u32 16, %s32
        %p426 = scmp.lt.s32.totalorder %s32, 0
        %s427 = scalar_select %p426, %s32, 0
        %s428 = scalar_lea.vmem %s7, %s427
        %p430 = scmp.eq.s32.totalorder %s31, 0
        %p431 = scmp.eq.s32.totalorder %s32, 0
        %p432 = pnand %p430, %p431
        %p433 = pneg %p432
        %p434 = scmp.eq.s32.totalorder %s33, 0
        %p435 = pnand %p433, %p434
        %p436 = pneg %p435
        // Predicated region
        $region61: #{tpu_custom_call.1} parent=55 // pred_check
          _
        $region62: #{tpu_custom_call.1} parent=55 // pred_check_branch
          %438 = sbr.rel (%p435) target = $region64
        $region63: #{tpu_custom_call.1} parent=55 // pred_region
          $region65: #{tpu_custom_call.1} parent=63
            #allocation11 [shape = 's32[1]{0}', space=sflag, size = 0x4, scoped, tag = 'scoped memory for tpu_custom_call.1']
            %p440 = scmp.lt.u32.totalorder 64, 8
            %p441 = pneg %p440
            // Predicated region
            $region66: #{tpu_custom_call.1} parent=65 // pred_check
              _
            $region67: #{tpu_custom_call.1} parent=65 // pred_check_branch
              %443 = sbr.rel (%p440) target = $region69
            $region68: #{tpu_custom_call.1} parent=65 // pred_region
              %s459 = sand.u32 64, 7
              %p460 = scmp.eq.s32.totalorder %s459, 0
              // Predicated region
              $region81: #{tpu_custom_call.1} parent=68 // pred_check
                %p461 = pneg %p460
              $region82: #{tpu_custom_call.1} parent=68 // pred_check_branch
                %463 = sbr.rel (%p461) target = $region84
              $region83: #{tpu_custom_call.1} parent=68 // pred_region
                loop: start=0, step=1, limit=1
                $region85: #{tpu_custom_call.1} parent=83 // loop_pre_header
                  _
                $region86: #{tpu_custom_call.1} parent=83 // loop_header
                  %s465 = sphi 0, %s469
                  %p466 = scmp.ge.s32.totalorder %s465, 1
                  %s470 = sphi %s0, %s0
                  %s471 = sphi [#allocation2], [#allocation2]
                $region87: #{tpu_custom_call.1} parent=83 // loop_header_branch
                  %468 = sbr.rel (%p466) target = $region91
                $region88: #{tpu_custom_call.1} parent=83 // loop_body
                  %v472 = vld [vmem:[%s470] sm:$0xff]
                  %473 = vst [vmem:[%s471] sm:$0xff] %v472
                  %v474 = vld [vmem:[%s470 + $0x8] sm:$0xff]
                  %475 = vst [vmem:[%s471 + $0x8] sm:$0xff] %v474
                  %v476 = vld [vmem:[%s470 + $0x10] sm:$0xff]
                  %477 = vst [vmem:[%s471 + $0x10] sm:$0xff] %v476
                  %v478 = vld [vmem:[%s470 + $0x18] sm:$0xff]
                  %479 = vst [vmem:[%s471 + $0x18] sm:$0xff] %v478
                  %v480 = vld [vmem:[%s470 + $0x20] sm:$0xff]
                  %481 = vst [vmem:[%s471 + $0x20] sm:$0xff] %v480
                  %v482 = vld [vmem:[%s470 + $0x28] sm:$0xff]
                  %483 = vst [vmem:[%s471 + $0x28] sm:$0xff] %v482
                  %v484 = vld [vmem:[%s470 + $0x30] sm:$0xff]
                  %485 = vst [vmem:[%s471 + $0x30] sm:$0xff] %v484
                  %v486 = vld [vmem:[%s470 + $0x38] sm:$0xff]
                  %487 = vst [vmem:[%s471 + $0x38] sm:$0xff] %v486
                $region89: #{tpu_custom_call.1} parent=83 // loop_footer
                  %s469 = sadd.s32 1, %s465
                $region90: #{tpu_custom_call.1} parent=83 // loop_footer_branch
                  %464 = sbr.rel target = $region86
                $region91: #{tpu_custom_call.1} parent=83 // loop_exit
                  _
              $region84: #{tpu_custom_call.1} parent=68 // pred_fallthru
                _
              %p488 = pneg %p460
              // Predicated region
              $region92: #{tpu_custom_call.1} parent=68 // pred_check
                _
              $region93: #{tpu_custom_call.1} parent=68 // pred_check_branch
                %490 = sbr.rel (%p460) target = $region95
              $region94: #{tpu_custom_call.1} parent=68 // pred_region
                %s491 = sand.u32 64, 7
              $region95: #{tpu_custom_call.1} parent=68 // pred_fallthru
                _
            $region69: #{tpu_custom_call.1} parent=65 // pred_fallthru
              _
            // Predicated region
            $region70: #{tpu_custom_call.1} parent=65 // pred_check
              %p444 = pneg %p440
            $region71: #{tpu_custom_call.1} parent=65 // pred_check_branch
              %446 = sbr.rel (%p444) target = $region73
            $region72: #{tpu_custom_call.1} parent=65 // pred_region
              %s447 = sshll.u32 1, 64
              %s448 = ssub.s32 %s447, 1
              loop: start=0, step=1, limit=1
              $region74: #{tpu_custom_call.1} parent=72 // loop_pre_header
                _
              $region75: #{tpu_custom_call.1} parent=72 // loop_header
                %s450 = sphi 0, %s454
                %p451 = scmp.ge.s32.totalorder %s450, 1
                %s455 = sphi %s0, %s0
                %s456 = sphi [#allocation2], [#allocation2]
              $region76: #{tpu_custom_call.1} parent=72 // loop_header_branch
                %453 = sbr.rel (%p451) target = $region80
              $region77: #{tpu_custom_call.1} parent=72 // loop_body
                %v457 = vld [vmem:[%s455] sm:%s448]
                %458 = vst [vmem:[%s456] sm:%s448] %v457
              $region78: #{tpu_custom_call.1} parent=72 // loop_footer
                %s454 = sadd.s32 1, %s450
              $region79: #{tpu_custom_call.1} parent=72 // loop_footer_branch
                %449 = sbr.rel target = $region75
              $region80: #{tpu_custom_call.1} parent=72 // loop_exit
                _
            $region73: #{tpu_custom_call.1} parent=65 // pred_fallthru
              _
            // Predicated region
            $region96: #{tpu_custom_call.1} parent=65 // pred_check
              _
            $region97: #{tpu_custom_call.1} parent=65 // pred_check_branch
              %494 = sbr.rel (0) target = $region99
            $region98: #{tpu_custom_call.1} parent=65 // pred_region
              %495 = vsyncadd [#allocation11], 1024
            $region99: #{tpu_custom_call.1} parent=65 // pred_fallthru
              _
            %s496 = smul.u32 4, 16
            %s497 = smul.u32 %s496, 1
            %s498 = sshll.u32 %s497, 4
            %499 = dma.done [#allocation11], %s498
        $region64: #{tpu_custom_call.1} parent=55 // pred_fallthru
          _
        // Predicated region
        $region100: #{tpu_custom_call.1} parent=55 // pred_check
          %p500 = pneg %p434
        $region101: #{tpu_custom_call.1} parent=55 // pred_check_branch
          %502 = sbr.rel (%p500) target = $region103
        $region102: #{tpu_custom_call.1} parent=55 // pred_region
          %503 = vst [vmem:[#allocation3] sm:$0xff] 0.0
          %504 = vst [vmem:[#allocation3 + $0x8] sm:$0xff] 0.0
          %505 = vst [vmem:[#allocation3 + $0x10] sm:$0xff] 0.0
          %506 = vst [vmem:[#allocation3 + $0x18] sm:$0xff] 0.0
          %507 = vst [vmem:[#allocation3 + $0x20] sm:$0xff] 0.0
          %508 = vst [vmem:[#allocation3 + $0x28] sm:$0xff] 0.0
          %509 = vst [vmem:[#allocation3 + $0x30] sm:$0xff] 0.0
          %510 = vst [vmem:[#allocation3 + $0x38] sm:$0xff] 0.0
          %511 = vst [vmem:[#allocation3 + $0x40] sm:$0xff] 0.0
          %512 = vst [vmem:[#allocation3 + $0x48] sm:$0xff] 0.0
          %513 = vst [vmem:[#allocation3 + $0x50] sm:$0xff] 0.0
          %514 = vst [vmem:[#allocation3 + $0x58] sm:$0xff] 0.0
          %515 = vst [vmem:[#allocation3 + $0x60] sm:$0xff] 0.0
          %516 = vst [vmem:[#allocation3 + $0x68] sm:$0xff] 0.0
          %517 = vst [vmem:[#allocation3 + $0x70] sm:$0xff] 0.0
          %518 = vst [vmem:[#allocation3 + $0x78] sm:$0xff] 0.0
        $region103: #{tpu_custom_call.1} parent=55 // pred_fallthru
          _
        %p519 = scmp.lt.s32.totalorder %s31, 0
        %s520 = ssub.s32 0, %s31
        %s521 = scalar_select %p519, %s520, %s31
        %s522 = sand.u32 %s521, 1
        %s523 = ssub.s32 0, %s522
        %s524 = scalar_select %p519, %s523, %s522
        %p525 = scmp.ne.s32.totalorder %s524, 0
        %p526 = scmp.lt.s32.totalorder %s524, 0
        %p527 = pnand %p526, %p525
        %p528 = pneg %p527
        %s529 = sadd.s32 %s524, 2
        %s530 = scalar_select %p528, %s529, %s524
        %s531 = smul.u32 %s33, 128
        %s532 = sshra.s32 %s531, 3
        %s533 = sand.u32 %s531, 7
        %s534 = smul.u32 %s530, 16
        %s535 = sadd.s32 %s532, %s534
        %s536 = smul.addr %s535, 4
        %s537 = scalar_lea.vmem [#allocation2], %s536
        %v538 = vld [vmem:[%s537] sm:$0xf]
        %v539 = vld [vmem:[%s537 + $0x4] sm:$0xf]
        %v540 = vld [vmem:[%s537 + $0x8] sm:$0xf]
        %v541 = vld [vmem:[%s537 + $0xc] sm:$0xf]
        %v542 = vld [vmem:[%s537 + $0x10] sm:$0xf]
        %v543 = vld [vmem:[%s537 + $0x14] sm:$0xf]
        %v544 = vld [vmem:[%s537 + $0x18] sm:$0xf]
        %v545 = vld [vmem:[%s537 + $0x1c] sm:$0xf]
        %v546 = vld [vmem:[%s537 + $0x20] sm:$0xf]
        %v547 = vld [vmem:[%s537 + $0x24] sm:$0xf]
        %v548 = vld [vmem:[%s537 + $0x28] sm:$0xf]
        %v549 = vld [vmem:[%s537 + $0x2c] sm:$0xf]
        %v550 = vld [vmem:[%s537 + $0x30] sm:$0xf]
        %v551 = vld [vmem:[%s537 + $0x34] sm:$0xf]
        %v552 = vld [vmem:[%s537 + $0x38] sm:$0xf]
        %v553 = vld [vmem:[%s537 + $0x3c] sm:$0xf]
        %v554 = vld [vmem:[#allocation3] sm:$0xff]
        %v555 = vld [vmem:[#allocation3 + $0x8] sm:$0xff]
        %v556 = vld [vmem:[#allocation3 + $0x10] sm:$0xff]
        %v557 = vld [vmem:[#allocation3 + $0x18] sm:$0xff]
        %v558 = vld [vmem:[#allocation3 + $0x20] sm:$0xff]
        %v559 = vld [vmem:[#allocation3 + $0x28] sm:$0xff]
        %v560 = vld [vmem:[#allocation3 + $0x30] sm:$0xff]
        %v561 = vld [vmem:[#allocation3 + $0x38] sm:$0xff]
        %v562 = vld [vmem:[#allocation3 + $0x40] sm:$0xff]
        %v563 = vld [vmem:[#allocation3 + $0x48] sm:$0xff]
        %v564 = vld [vmem:[#allocation3 + $0x50] sm:$0xff]
        %v565 = vld [vmem:[#allocation3 + $0x58] sm:$0xff]
        %v566 = vld [vmem:[#allocation3 + $0x60] sm:$0xff]
        %v567 = vld [vmem:[#allocation3 + $0x68] sm:$0xff]
        %v568 = vld [vmem:[#allocation3 + $0x70] sm:$0xff]
        %v569 = vld [vmem:[#allocation3 + $0x78] sm:$0xff]
        %v570 = vld [vmem:[%s418] sm:$0xf]
        %v571 = vld [vmem:[%s418 + $0x4] sm:$0xf]
        %v572 = vld [vmem:[%s418 + $0x8] sm:$0xf]
        %v573 = vld [vmem:[%s418 + $0xc] sm:$0xf]
        %v574 = vld [vmem:[%s418 + $0x10] sm:$0xf]
        %v575 = vld [vmem:[%s418 + $0x14] sm:$0xf]
        %v576 = vld [vmem:[%s418 + $0x18] sm:$0xf]
        %v577 = vld [vmem:[%s418 + $0x1c] sm:$0xf]
        %v578 = vld [vmem:[%s418 + $0x20] sm:$0xf]
        %v579 = vld [vmem:[%s418 + $0x24] sm:$0xf]
        %v580 = vld [vmem:[%s418 + $0x28] sm:$0xf]
        %v581 = vld [vmem:[%s418 + $0x2c] sm:$0xf]
        %v582 = vld [vmem:[%s418 + $0x30] sm:$0xf]
        %v583 = vld [vmem:[%s418 + $0x34] sm:$0xf]
        %v584 = vld [vmem:[%s418 + $0x38] sm:$0xf]
        %v585 = vld [vmem:[%s418 + $0x3c] sm:$0xf]
        %v602 = vunpack.c.l.b16 %v570
        %v603 = vunpack.c.l.b16 %v571
        %v604 = vunpack.c.l.b16 %v572
        %v605 = vunpack.c.l.b16 %v573
        %v606 = vunpack.c.l.b16 %v574
        %v607 = vunpack.c.l.b16 %v575
        %v608 = vunpack.c.l.b16 %v576
        %v609 = vunpack.c.l.b16 %v577
        %v610 = vunpack.c.l.b16 %v578
        %v611 = vunpack.c.l.b16 %v579
        %v612 = vunpack.c.l.b16 %v580
        %v613 = vunpack.c.l.b16 %v581
        %v614 = vunpack.c.l.b16 %v582
        %v615 = vunpack.c.l.b16 %v583
        %v616 = vunpack.c.l.b16 %v584
        %v617 = vunpack.c.l.b16 %v585
        %v618 = vpack.c.b16 %v603, %v602
        %v619 = vpack.c.b16 %v605, %v604
        %v620 = vpack.c.b16 %v607, %v606
        %v621 = vpack.c.b16 %v609, %v608
        %v622 = vpack.c.b16 %v611, %v610
        %v623 = vpack.c.b16 %v613, %v612
        %v624 = vpack.c.b16 %v615, %v614
        %v625 = vpack.c.b16 %v617, %v616
        %v650 = vunpack.c.l.b16 %v538
        %v651 = vunpack.c.l.b16 %v539
        %v652 = vunpack.c.l.b16 %v540
        %v653 = vunpack.c.l.b16 %v541
        %v654 = vunpack.c.l.b16 %v542
        %v655 = vunpack.c.l.b16 %v543
        %v656 = vunpack.c.l.b16 %v544
        %v657 = vunpack.c.l.b16 %v545
        %v658 = vunpack.c.l.b16 %v546
        %v659 = vunpack.c.l.b16 %v547
        %v660 = vunpack.c.l.b16 %v548
        %v661 = vunpack.c.l.b16 %v549
        %v662 = vunpack.c.l.b16 %v550
        %v663 = vunpack.c.l.b16 %v551
        %v664 = vunpack.c.l.b16 %v552
        %v665 = vunpack.c.l.b16 %v553
        %v666 = vpack.c.b16 %v651, %v650
        %v667 = vpack.c.b16 %v653, %v652
        %v668 = vpack.c.b16 %v655, %v654
        %v669 = vpack.c.b16 %v657, %v656
        %v670 = vpack.c.b16 %v659, %v658
        %v671 = vpack.c.b16 %v661, %v660
        %v672 = vpack.c.b16 %v663, %v662
        %v673 = vpack.c.b16 %v665, %v664
        %682 = vmatprep.subr.bf16.mxu0 0
        %683 = vmatpush1.bf16.msra.mxu0 %v673
        %684 = vmatprep.subr.bf16.mxu0 0
        %685 = vmatpush1.bf16.msra.mxu0 %v672
        %686 = vmatprep.subr.bf16.mxu0 0
        %687 = vmatpush1.bf16.msra.mxu0 %v671
        %688 = vmatprep.subr.bf16.mxu0 0
        %689 = vmatpush1.bf16.msra.mxu0 %v670
        %690 = vmatprep.subr.bf16.mxu0 0
        %691 = vmatpush1.bf16.msra.mxu0 %v669
        %692 = vmatprep.subr.bf16.mxu0 0
        %693 = vmatpush1.bf16.msra.mxu0 %v668
        %694 = vmatprep.subr.bf16.mxu0 0
        %695 = vmatpush1.bf16.msra.mxu0 %v667
        %696 = vmatprep.subr.bf16.mxu0 0
        %697 = vmatpush1.bf16.msra.mxu0 %v666
        %698 = vmatprep.subr.bf16.mxu0 0
        %699 = vmatpush2.bf16.msra.mxu0 0
        %700 = vmatprep.subr.bf16.mxu0 0
        %701 = vmatpush2.bf16.msra.mxu0 0
        %702 = vmatprep.subr.bf16.mxu0 0
        %703 = vmatpush2.bf16.msra.mxu0 0
        %704 = vmatprep.subr.bf16.mxu0 0
        %705 = vmatpush2.bf16.msra.mxu0 0
        %706 = vmatprep.subr.bf16.mxu0 0
        %707 = vmatpush2.bf16.msra.mxu0 0
        %708 = vmatprep.subr.bf16.mxu0 0
        %709 = vmatpush2.bf16.msra.mxu0 0
        %710 = vmatprep.subr.bf16.mxu0 0
        %711 = vmatpush2.bf16.msra.mxu0 0
        %712 = vmatprep.subr.bf16.mxu0 0
        %713 = vmatpush2.bf16.msra.mxu0 0
        %714 = vmatprep.mubr.bf16.mxu0 0
        %715 = vmatmul.mubr.bf16.gmra.mxu0 %v618
        %v716 = vpop.f32.mrf.mxu0
        %v717 = vadd.f32 0.0, %v716
        %v718 = vpop.f32.mrf.mxu0
        %v719 = vpop.f32.mrf.mxu0
        %v720 = vadd.f32 0.0, %v719
        %v721 = vpop.f32.mrf.mxu0
        %722 = vmatprep.mubr.bf16.mxu0 0
        %723 = vmatmul.mubr.bf16.gmra.mxu0 %v619
        %v724 = vpop.f32.mrf.mxu0
        %v725 = vadd.f32 0.0, %v724
        %v726 = vpop.f32.mrf.mxu0
        %v727 = vpop.f32.mrf.mxu0
        %v728 = vadd.f32 0.0, %v727
        %v729 = vpop.f32.mrf.mxu0
        %730 = vmatprep.mubr.bf16.mxu0 0
        %731 = vmatmul.mubr.bf16.gmra.mxu0 %v620
        %v732 = vpop.f32.mrf.mxu0
        %v733 = vadd.f32 0.0, %v732
        %v734 = vpop.f32.mrf.mxu0
        %v735 = vpop.f32.mrf.mxu0
        %v736 = vadd.f32 0.0, %v735
        %v737 = vpop.f32.mrf.mxu0
        %738 = vmatprep.mubr.bf16.mxu0 0
        %739 = vmatmul.mubr.bf16.gmra.mxu0 %v621
        %v740 = vpop.f32.mrf.mxu0
        %v741 = vadd.f32 0.0, %v740
        %v742 = vpop.f32.mrf.mxu0
        %v743 = vpop.f32.mrf.mxu0
        %v744 = vadd.f32 0.0, %v743
        %v745 = vpop.f32.mrf.mxu0
        %746 = vmatprep.mubr.bf16.mxu0 0
        %747 = vmatmul.mubr.bf16.gmra.mxu0 %v622
        %v748 = vpop.f32.mrf.mxu0
        %v749 = vadd.f32 0.0, %v748
        %v750 = vpop.f32.mrf.mxu0
        %v751 = vpop.f32.mrf.mxu0
        %v752 = vadd.f32 0.0, %v751
        %v753 = vpop.f32.mrf.mxu0
        %754 = vmatprep.mubr.bf16.mxu0 0
        %755 = vmatmul.mubr.bf16.gmra.mxu0 %v623
        %v756 = vpop.f32.mrf.mxu0
        %v757 = vadd.f32 0.0, %v756
        %v758 = vpop.f32.mrf.mxu0
        %v759 = vpop.f32.mrf.mxu0
        %v760 = vadd.f32 0.0, %v759
        %v761 = vpop.f32.mrf.mxu0
        %762 = vmatprep.mubr.bf16.mxu0 0
        %763 = vmatmul.mubr.bf16.gmra.mxu0 %v624
        %v764 = vpop.f32.mrf.mxu0
        %v765 = vadd.f32 0.0, %v764
        %v766 = vpop.f32.mrf.mxu0
        %v767 = vpop.f32.mrf.mxu0
        %v768 = vadd.f32 0.0, %v767
        %v769 = vpop.f32.mrf.mxu0
        %770 = vmatprep.mubr.bf16.mxu0 0
        %771 = vmatmul.mubr.bf16.gmra.mxu0 %v625
        %v772 = vpop.f32.mrf.mxu0
        %v773 = vadd.f32 0.0, %v772
        %v774 = vpop.f32.mrf.mxu0
        %v775 = vpop.f32.mrf.mxu0
        %v776 = vadd.f32 0.0, %v775
        %v777 = vpop.f32.mrf.mxu0
        %778 = vdwg.mxu0
        %v779 = vadd.f32 %v554, %v717
        %v780 = vadd.f32 %v555, %v720
        %v781 = vadd.f32 %v556, %v725
        %v782 = vadd.f32 %v557, %v728
        %v783 = vadd.f32 %v558, %v733
        %v784 = vadd.f32 %v559, %v736
        %v785 = vadd.f32 %v560, %v741
        %v786 = vadd.f32 %v561, %v744
        %v787 = vadd.f32 %v562, %v749
        %v788 = vadd.f32 %v563, %v752
        %v789 = vadd.f32 %v564, %v757
        %v790 = vadd.f32 %v565, %v760
        %v791 = vadd.f32 %v566, %v765
        %v792 = vadd.f32 %v567, %v768
        %v793 = vadd.f32 %v568, %v773
        %v794 = vadd.f32 %v569, %v776
        %795 = vst [vmem:[#allocation3] sm:$0xff] %v779
        %796 = vst [vmem:[#allocation3 + $0x8] sm:$0xff] %v780
        %797 = vst [vmem:[#allocation3 + $0x10] sm:$0xff] %v781
        %798 = vst [vmem:[#allocation3 + $0x18] sm:$0xff] %v782
        %799 = vst [vmem:[#allocation3 + $0x20] sm:$0xff] %v783
        %800 = vst [vmem:[#allocation3 + $0x28] sm:$0xff] %v784
        %801 = vst [vmem:[#allocation3 + $0x30] sm:$0xff] %v785
        %802 = vst [vmem:[#allocation3 + $0x38] sm:$0xff] %v786
        %803 = vst [vmem:[#allocation3 + $0x40] sm:$0xff] %v787
        %804 = vst [vmem:[#allocation3 + $0x48] sm:$0xff] %v788
        %805 = vst [vmem:[#allocation3 + $0x50] sm:$0xff] %v789
        %806 = vst [vmem:[#allocation3 + $0x58] sm:$0xff] %v790
        %807 = vst [vmem:[#allocation3 + $0x60] sm:$0xff] %v791
        %808 = vst [vmem:[#allocation3 + $0x68] sm:$0xff] %v792
        %809 = vst [vmem:[#allocation3 + $0x70] sm:$0xff] %v793
        %810 = vst [vmem:[#allocation3 + $0x78] sm:$0xff] %v794
        // Predicated region
        $region104: #{tpu_custom_call.1} parent=55 // pred_check
          %p811 = pneg %p434
        $region105: #{tpu_custom_call.1} parent=55 // pred_check_branch
          %813 = sbr.rel (%p811) target = $region107
        $region106: #{tpu_custom_call.1} parent=55 // pred_region
          %s814 = smul.u32 %s32, 128
          %v815 = vld [vmem:[#allocation3] sm:$0xff]
          %v816 = vld [vmem:[#allocation3 + $0x8] sm:$0xff]
          %v817 = vld [vmem:[#allocation3 + $0x10] sm:$0xff]
          %v818 = vld [vmem:[#allocation3 + $0x18] sm:$0xff]
          %v819 = vld [vmem:[#allocation3 + $0x20] sm:$0xff]
          %v820 = vld [vmem:[#allocation3 + $0x28] sm:$0xff]
          %v821 = vld [vmem:[#allocation3 + $0x30] sm:$0xff]
          %v822 = vld [vmem:[#allocation3 + $0x38] sm:$0xff]
          %v823 = vld [vmem:[#allocation3 + $0x40] sm:$0xff]
          %v824 = vld [vmem:[#allocation3 + $0x48] sm:$0xff]
          %v825 = vld [vmem:[#allocation3 + $0x50] sm:$0xff]
          %v826 = vld [vmem:[#allocation3 + $0x58] sm:$0xff]
          %v827 = vld [vmem:[#allocation3 + $0x60] sm:$0xff]
          %v828 = vld [vmem:[#allocation3 + $0x68] sm:$0xff]
          %v829 = vld [vmem:[#allocation3 + $0x70] sm:$0xff]
          %v830 = vld [vmem:[#allocation3 + $0x78] sm:$0xff]
          %v831 = vld [vmem:[%s424] sm:$0xff]
          %v832 = vld [vmem:[%s424 + $0x8] sm:$0xff]
          %v833 = vld [vmem:[%s424 + $0x10] sm:$0xff]
          %v834 = vld [vmem:[%s424 + $0x18] sm:$0xff]
          %v835 = vld [vmem:[%s424 + $0x20] sm:$0xff]
          %v836 = vld [vmem:[%s424 + $0x28] sm:$0xff]
          %v837 = vld [vmem:[%s424 + $0x30] sm:$0xff]
          %v838 = vld [vmem:[%s424 + $0x38] sm:$0xff]
          %v839 = vld [vmem:[%s424 + $0x40] sm:$0xff]
          %v840 = vld [vmem:[%s424 + $0x48] sm:$0xff]
          %v841 = vld [vmem:[%s424 + $0x50] sm:$0xff]
          %v842 = vld [vmem:[%s424 + $0x58] sm:$0xff]
          %v843 = vld [vmem:[%s424 + $0x60] sm:$0xff]
          %v844 = vld [vmem:[%s424 + $0x68] sm:$0xff]
          %v845 = vld [vmem:[%s424 + $0x70] sm:$0xff]
          %v846 = vld [vmem:[%s424 + $0x78] sm:$0xff]
          %848 = vset.pattern.permute.xlu0 0
          %849 = vperm.xlu0 %848, %v831
          %v850 = vpop.permute.xlu0 %849
          %853 = vset.pattern.permute.xlu0 0
          %854 = vperm.xlu0 %853, %v832
          %v855 = vpop.permute.xlu0 %854
          %858 = vset.pattern.permute.xlu0 0
          %859 = vperm.xlu0 %858, %v833
          %v860 = vpop.permute.xlu0 %859
          %863 = vset.pattern.permute.xlu0 0
          %864 = vperm.xlu0 %863, %v834
          %v865 = vpop.permute.xlu0 %864
          %868 = vset.pattern.permute.xlu0 0
          %869 = vperm.xlu0 %868, %v835
          %v870 = vpop.permute.xlu0 %869
          %873 = vset.pattern.permute.xlu0 0
          %874 = vperm.xlu0 %873, %v836
          %v875 = vpop.permute.xlu0 %874
          %878 = vset.pattern.permute.xlu0 0
          %879 = vperm.xlu0 %878, %v837
          %v880 = vpop.permute.xlu0 %879
          %883 = vset.pattern.permute.xlu0 0
          %884 = vperm.xlu0 %883, %v838
          %v885 = vpop.permute.xlu0 %884
          %888 = vset.pattern.permute.xlu0 0
          %889 = vperm.xlu0 %888, %v839
          %v890 = vpop.permute.xlu0 %889
          %893 = vset.pattern.permute.xlu0 0
          %894 = vperm.xlu0 %893, %v840
          %v895 = vpop.permute.xlu0 %894
          %898 = vset.pattern.permute.xlu0 0
          %899 = vperm.xlu0 %898, %v841
          %v900 = vpop.permute.xlu0 %899
          %903 = vset.pattern.permute.xlu0 0
          %904 = vperm.xlu0 %903, %v842
          %v905 = vpop.permute.xlu0 %904
          %908 = vset.pattern.permute.xlu0 0
          %909 = vperm.xlu0 %908, %v843
          %v910 = vpop.permute.xlu0 %909
          %913 = vset.pattern.permute.xlu0 0
          %914 = vperm.xlu0 %913, %v844
          %v915 = vpop.permute.xlu0 %914
          %918 = vset.pattern.permute.xlu0 0
          %919 = vperm.xlu0 %918, %v845
          %v920 = vpop.permute.xlu0 %919
          %923 = vset.pattern.permute.xlu0 0
          %924 = vperm.xlu0 %923, %v846
          %v925 = vpop.permute.xlu0 %924
          %v927 = vmul.f32 %v815, %v850
          %v928 = vmul.f32 %v816, %v855
          %v929 = vmul.f32 %v817, %v860
          %v930 = vmul.f32 %v818, %v865
          %v931 = vmul.f32 %v819, %v870
          %v932 = vmul.f32 %v820, %v875
          %v933 = vmul.f32 %v821, %v880
          %v934 = vmul.f32 %v822, %v885
          %v935 = vmul.f32 %v823, %v890
          %v936 = vmul.f32 %v824, %v895
          %v937 = vmul.f32 %v825, %v900
          %v938 = vmul.f32 %v826, %v905
          %v939 = vmul.f32 %v827, %v910
          %v940 = vmul.f32 %v828, %v915
          %v941 = vmul.f32 %v829, %v920
          %v942 = vmul.f32 %v830, %v925
          %v943 = vpack.c.bf16 %v928, %v927
          %v944 = vpack.c.bf16 %v930, %v929
          %v945 = vpack.c.bf16 %v932, %v931
          %v946 = vpack.c.bf16 %v934, %v933
          %v947 = vpack.c.bf16 %v936, %v935
          %v948 = vpack.c.bf16 %v938, %v937
          %v949 = vpack.c.bf16 %v940, %v939
          %v950 = vpack.c.bf16 %v942, %v941
          %p951 = scmp.lt.s32.totalorder %s31, 2
          // Predicated region
          $region108: #{tpu_custom_call.1} parent=106 // pred_check
            %p952 = pneg %p951
          $region109: #{tpu_custom_call.1} parent=106 // pred_check_branch
            %954 = sbr.rel (%p952) target = $region111
          $region110: #{tpu_custom_call.1} parent=106 // pred_region
            %s955 = ssub.s32 1, %s530
            %v964 = vunpack.c.l.b16 %v943
            %v965 = vunpack.c.h.b16 %v943
            %v966 = vunpack.c.l.b16 %v944
            %v967 = vunpack.c.h.b16 %v944
            %v968 = vunpack.c.l.b16 %v945
            %v969 = vunpack.c.h.b16 %v945
            %v970 = vunpack.c.l.b16 %v946
            %v971 = vunpack.c.h.b16 %v946
            %v972 = vunpack.c.l.b16 %v947
            %v973 = vunpack.c.h.b16 %v947
            %v974 = vunpack.c.l.b16 %v948
            %v975 = vunpack.c.h.b16 %v948
            %v976 = vunpack.c.l.b16 %v949
            %v977 = vunpack.c.h.b16 %v949
            %v978 = vunpack.c.l.b16 %v950
            %v979 = vunpack.c.h.b16 %v950
            %v980 = vpack.c.b16 %v964, %v964
            %v981 = vpack.c.b16 %v965, %v965
            %v982 = vpack.c.b16 %v966, %v966
            %v983 = vpack.c.b16 %v967, %v967
            %v984 = vpack.c.b16 %v968, %v968
            %v985 = vpack.c.b16 %v969, %v969
            %v986 = vpack.c.b16 %v970, %v970
            %v987 = vpack.c.b16 %v971, %v971
            %v988 = vpack.c.b16 %v972, %v972
            %v989 = vpack.c.b16 %v973, %v973
            %v990 = vpack.c.b16 %v974, %v974
            %v991 = vpack.c.b16 %v975, %v975
            %v992 = vpack.c.b16 %v976, %v976
            %v993 = vpack.c.b16 %v977, %v977
            %v994 = vpack.c.b16 %v978, %v978
            %v995 = vpack.c.b16 %v979, %v979
            %s1012 = sshra.s32 %s814, 3
            %s1013 = sand.u32 %s814, 7
            %s1014 = smul.u32 %s955, 16
            %s1015 = sadd.s32 %s1012, %s1014
            %s1016 = smul.addr %s1015, 4
            %s1017 = scalar_lea.vmem [#allocation2], %s1016
            %1018 = vst [vmem:[%s1017] sm:$0xf] %v980
            %1019 = vst [vmem:[%s1017 + $0x4] sm:$0xf] %v981
            %1020 = vst [vmem:[%s1017 + $0x8] sm:$0xf] %v982
            %1021 = vst [vmem:[%s1017 + $0xc] sm:$0xf] %v983
            %1022 = vst [vmem:[%s1017 + $0x10] sm:$0xf] %v984
            %1023 = vst [vmem:[%s1017 + $0x14] sm:$0xf] %v985
            %1024 = vst [vmem:[%s1017 + $0x18] sm:$0xf] %v986
            %1025 = vst [vmem:[%s1017 + $0x1c] sm:$0xf] %v987
            %1026 = vst [vmem:[%s1017 + $0x20] sm:$0xf] %v988
            %1027 = vst [vmem:[%s1017 + $0x24] sm:$0xf] %v989
            %1028 = vst [vmem:[%s1017 + $0x28] sm:$0xf] %v990
            %1029 = vst [vmem:[%s1017 + $0x2c] sm:$0xf] %v991
            %1030 = vst [vmem:[%s1017 + $0x30] sm:$0xf] %v992
            %1031 = vst [vmem:[%s1017 + $0x34] sm:$0xf] %v993
            %1032 = vst [vmem:[%s1017 + $0x38] sm:$0xf] %v994
            %1033 = vst [vmem:[%s1017 + $0x3c] sm:$0xf] %v995
          $region111: #{tpu_custom_call.1} parent=106 // pred_fallthru
            _
          %p1034 = scmp.eq.s32.totalorder %s31, 2
          // Predicated region
          $region112: #{tpu_custom_call.1} parent=106 // pred_check
            %p1035 = pneg %p1034
          $region113: #{tpu_custom_call.1} parent=106 // pred_check_branch
            %1037 = sbr.rel (%p1035) target = $region115
          $region114: #{tpu_custom_call.1} parent=106 // pred_region
            %v1038 = vld [vmem:[%s3] sm:$0xf]
            %v1039 = vld [vmem:[%s3 + $0x4] sm:$0xf]
            %v1040 = vld [vmem:[%s3 + $0x8] sm:$0xf]
            %v1041 = vld [vmem:[%s3 + $0xc] sm:$0xf]
            %v1042 = vld [vmem:[%s3 + $0x10] sm:$0xf]
            %v1043 = vld [vmem:[%s3 + $0x14] sm:$0xf]
            %v1044 = vld [vmem:[%s3 + $0x18] sm:$0xf]
            %v1045 = vld [vmem:[%s3 + $0x1c] sm:$0xf]
            %v1046 = vld [vmem:[%s3 + $0x20] sm:$0xf]
            %v1047 = vld [vmem:[%s3 + $0x24] sm:$0xf]
            %v1048 = vld [vmem:[%s3 + $0x28] sm:$0xf]
            %v1049 = vld [vmem:[%s3 + $0x2c] sm:$0xf]
            %v1050 = vld [vmem:[%s3 + $0x30] sm:$0xf]
            %v1051 = vld [vmem:[%s3 + $0x34] sm:$0xf]
            %v1052 = vld [vmem:[%s3 + $0x38] sm:$0xf]
            %v1053 = vld [vmem:[%s3 + $0x3c] sm:$0xf]
            %v1054 = vld [vmem:[%s4] sm:$0x1]
            %v1056 = vlaneseq
            %v1057 = vshrl.u32 %v1056, 7
            %v1058 = vsub.s32 0, %v1057
            %v1059 = vrot.slane %v1054, %v1058
            %v1077 = vunpack.c.l.b16 %v1038
            %v1078 = vunpack.c.l.b16 %v1039
            %v1079 = vunpack.c.l.b16 %v1040
            %v1080 = vunpack.c.l.b16 %v1041
            %v1081 = vunpack.c.l.b16 %v1042
            %v1082 = vunpack.c.l.b16 %v1043
            %v1083 = vunpack.c.l.b16 %v1044
            %v1084 = vunpack.c.l.b16 %v1045
            %v1085 = vunpack.c.l.b16 %v1046
            %v1086 = vunpack.c.l.b16 %v1047
            %v1087 = vunpack.c.l.b16 %v1048
            %v1088 = vunpack.c.l.b16 %v1049
            %v1089 = vunpack.c.l.b16 %v1050
            %v1090 = vunpack.c.l.b16 %v1051
            %v1091 = vunpack.c.l.b16 %v1052
            %v1092 = vunpack.c.l.b16 %v1053
            %v1093 = vpack.c.b16 %v1078, %v1077
            %v1094 = vpack.c.b16 %v1080, %v1079
            %v1095 = vpack.c.b16 %v1082, %v1081
            %v1096 = vpack.c.b16 %v1084, %v1083
            %v1097 = vpack.c.b16 %v1086, %v1085
            %v1098 = vpack.c.b16 %v1088, %v1087
            %v1099 = vpack.c.b16 %v1090, %v1089
            %v1100 = vpack.c.b16 %v1092, %v1091
            %1109 = vmatprep.subr.bf16.mxu0 0
            %1110 = vmatpush1.bf16.msra.mxu0 %v1100
            %1111 = vmatprep.subr.bf16.mxu0 0
            %1112 = vmatpush1.bf16.msra.mxu0 %v1099
            %1113 = vmatprep.subr.bf16.mxu0 0
            %1114 = vmatpush1.bf16.msra.mxu0 %v1098
            %1115 = vmatprep.subr.bf16.mxu0 0
            %1116 = vmatpush1.bf16.msra.mxu0 %v1097
            %1117 = vmatprep.subr.bf16.mxu0 0
            %1118 = vmatpush1.bf16.msra.mxu0 %v1096
            %1119 = vmatprep.subr.bf16.mxu0 0
            %1120 = vmatpush1.bf16.msra.mxu0 %v1095
            %1121 = vmatprep.subr.bf16.mxu0 0
            %1122 = vmatpush1.bf16.msra.mxu0 %v1094
            %1123 = vmatprep.subr.bf16.mxu0 0
            %1124 = vmatpush1.bf16.msra.mxu0 %v1093
            %1125 = vmatprep.subr.bf16.mxu0 0
            %1126 = vmatpush2.bf16.msra.mxu0 0
            %1127 = vmatprep.subr.bf16.mxu0 0
            %1128 = vmatpush2.bf16.msra.mxu0 0
            %1129 = vmatprep.subr.bf16.mxu0 0
            %1130 = vmatpush2.bf16.msra.mxu0 0
            %1131 = vmatprep.subr.bf16.mxu0 0
            %1132 = vmatpush2.bf16.msra.mxu0 0
            %1133 = vmatprep.subr.bf16.mxu0 0
            %1134 = vmatpush2.bf16.msra.mxu0 0
            %1135 = vmatprep.subr.bf16.mxu0 0
            %1136 = vmatpush2.bf16.msra.mxu0 0
            %1137 = vmatprep.subr.bf16.mxu0 0
            %1138 = vmatpush2.bf16.msra.mxu0 0
            %1139 = vmatprep.subr.bf16.mxu0 0
            %1140 = vmatpush2.bf16.msra.mxu0 0
            %1141 = vmatprep.mubr.bf16.mxu0 0
            %1142 = vmatmul.mubr.bf16.gmra.mxu0 %v943
            %v1143 = vpop.f32.mrf.mxu0
            %v1144 = vadd.f32 %v1059, %v1143
            %v1145 = vpop.f32.mrf.mxu0
            %v1146 = vpop.f32.mrf.mxu0
            %v1147 = vadd.f32 %v1059, %v1146
            %v1148 = vpop.f32.mrf.mxu0
            %1149 = vmatprep.mubr.bf16.mxu0 0
            %1150 = vmatmul.mubr.bf16.gmra.mxu0 %v944
            %v1151 = vpop.f32.mrf.mxu0
            %v1152 = vadd.f32 %v1059, %v1151
            %v1153 = vpop.f32.mrf.mxu0
            %v1154 = vpop.f32.mrf.mxu0
            %v1155 = vadd.f32 %v1059, %v1154
            %v1156 = vpop.f32.mrf.mxu0
            %1157 = vmatprep.mubr.bf16.mxu0 0
            %1158 = vmatmul.mubr.bf16.gmra.mxu0 %v945
            %v1159 = vpop.f32.mrf.mxu0
            %v1160 = vadd.f32 %v1059, %v1159
            %v1161 = vpop.f32.mrf.mxu0
            %v1162 = vpop.f32.mrf.mxu0
            %v1163 = vadd.f32 %v1059, %v1162
            %v1164 = vpop.f32.mrf.mxu0
            %1165 = vmatprep.mubr.bf16.mxu0 0
            %1166 = vmatmul.mubr.bf16.gmra.mxu0 %v946
            %v1167 = vpop.f32.mrf.mxu0
            %v1168 = vadd.f32 %v1059, %v1167
            %v1169 = vpop.f32.mrf.mxu0
            %v1170 = vpop.f32.mrf.mxu0
            %v1171 = vadd.f32 %v1059, %v1170
            %v1172 = vpop.f32.mrf.mxu0
            %1173 = vmatprep.mubr.bf16.mxu0 0
            %1174 = vmatmul.mubr.bf16.gmra.mxu0 %v947
            %v1175 = vpop.f32.mrf.mxu0
            %v1176 = vadd.f32 %v1059, %v1175
            %v1177 = vpop.f32.mrf.mxu0
            %v1178 = vpop.f32.mrf.mxu0
            %v1179 = vadd.f32 %v1059, %v1178
            %v1180 = vpop.f32.mrf.mxu0
            %1181 = vmatprep.mubr.bf16.mxu0 0
            %1182 = vmatmul.mubr.bf16.gmra.mxu0 %v948
            %v1183 = vpop.f32.mrf.mxu0
            %v1184 = vadd.f32 %v1059, %v1183
            %v1185 = vpop.f32.mrf.mxu0
            %v1186 = vpop.f32.mrf.mxu0
            %v1187 = vadd.f32 %v1059, %v1186
            %v1188 = vpop.f32.mrf.mxu0
            %1189 = vmatprep.mubr.bf16.mxu0 0
            %1190 = vmatmul.mubr.bf16.gmra.mxu0 %v949
            %v1191 = vpop.f32.mrf.mxu0
            %v1192 = vadd.f32 %v1059, %v1191
            %v1193 = vpop.f32.mrf.mxu0
            %v1194 = vpop.f32.mrf.mxu0
            %v1195 = vadd.f32 %v1059, %v1194
            %v1196 = vpop.f32.mrf.mxu0
            %1197 = vmatprep.mubr.bf16.mxu0 0
            %1198 = vmatmul.mubr.bf16.gmra.mxu0 %v950
            %v1199 = vpop.f32.mrf.mxu0
            %v1200 = vadd.f32 %v1059, %v1199
            %v1201 = vpop.f32.mrf.mxu0
            %v1202 = vpop.f32.mrf.mxu0
            %v1203 = vadd.f32 %v1059, %v1202
            %v1204 = vpop.f32.mrf.mxu0
            %1205 = vdwg.mxu0
            %v1206 = vmax.f32 %v1144, 0.0
            %v1207 = vmax.f32 %v1147, 0.0
            %v1208 = vmax.f32 %v1152, 0.0
            %v1209 = vmax.f32 %v1155, 0.0
            %v1210 = vmax.f32 %v1160, 0.0
            %v1211 = vmax.f32 %v1163, 0.0
            %v1212 = vmax.f32 %v1168, 0.0
            %v1213 = vmax.f32 %v1171, 0.0
            %v1214 = vmax.f32 %v1176, 0.0
            %v1215 = vmax.f32 %v1179, 0.0
            %v1216 = vmax.f32 %v1184, 0.0
            %v1217 = vmax.f32 %v1187, 0.0
            %v1218 = vmax.f32 %v1192, 0.0
            %v1219 = vmax.f32 %v1195, 0.0
            %v1220 = vmax.f32 %v1200, 0.0
            %v1221 = vmax.f32 %v1203, 0.0
            %v1222 = vpack.c.bf16 %v1207, %v1206
            %v1223 = vpack.c.bf16 %v1209, %v1208
            %v1224 = vpack.c.bf16 %v1211, %v1210
            %v1225 = vpack.c.bf16 %v1213, %v1212
            %v1226 = vpack.c.bf16 %v1215, %v1214
            %v1227 = vpack.c.bf16 %v1217, %v1216
            %v1228 = vpack.c.bf16 %v1219, %v1218
            %v1229 = vpack.c.bf16 %v1221, %v1220
            %v1230 = vld [vmem:[#allocation5] sm:$0xf]
            %v1231 = vld [vmem:[#allocation5 + $0x4] sm:$0xf]
            %v1232 = vld [vmem:[#allocation5 + $0x8] sm:$0xf]
            %v1233 = vld [vmem:[#allocation5 + $0xc] sm:$0xf]
            %v1234 = vld [vmem:[#allocation5 + $0x10] sm:$0xf]
            %v1235 = vld [vmem:[#allocation5 + $0x14] sm:$0xf]
            %v1236 = vld [vmem:[#allocation5 + $0x18] sm:$0xf]
            %v1237 = vld [vmem:[#allocation5 + $0x1c] sm:$0xf]
            %v1238 = vld [vmem:[#allocation5 + $0x20] sm:$0xf]
            %v1239 = vld [vmem:[#allocation5 + $0x24] sm:$0xf]
            %v1240 = vld [vmem:[#allocation5 + $0x28] sm:$0xf]
            %v1241 = vld [vmem:[#allocation5 + $0x2c] sm:$0xf]
            %v1242 = vld [vmem:[#allocation5 + $0x30] sm:$0xf]
            %v1243 = vld [vmem:[#allocation5 + $0x34] sm:$0xf]
            %v1244 = vld [vmem:[#allocation5 + $0x38] sm:$0xf]
            %v1245 = vld [vmem:[#allocation5 + $0x3c] sm:$0xf]
            %v1246 = vld [vmem:[%s6] sm:$0x1]
            %v1248 = vlaneseq
            %v1249 = vshrl.u32 %v1248, 7
            %v1250 = vsub.s32 0, %v1249
            %v1251 = vrot.slane %v1246, %v1250
            %v1269 = vunpack.c.l.b16 %v1230
            %v1270 = vunpack.c.l.b16 %v1231
            %v1271 = vunpack.c.l.b16 %v1232
            %v1272 = vunpack.c.l.b16 %v1233
            %v1273 = vunpack.c.l.b16 %v1234
            %v1274 = vunpack.c.l.b16 %v1235
            %v1275 = vunpack.c.l.b16 %v1236
            %v1276 = vunpack.c.l.b16 %v1237
            %v1277 = vunpack.c.l.b16 %v1238
            %v1278 = vunpack.c.l.b16 %v1239
            %v1279 = vunpack.c.l.b16 %v1240
            %v1280 = vunpack.c.l.b16 %v1241
            %v1281 = vunpack.c.l.b16 %v1242
            %v1282 = vunpack.c.l.b16 %v1243
            %v1283 = vunpack.c.l.b16 %v1244
            %v1284 = vunpack.c.l.b16 %v1245
            %v1285 = vpack.c.b16 %v1270, %v1269
            %v1286 = vpack.c.b16 %v1272, %v1271
            %v1287 = vpack.c.b16 %v1274, %v1273
            %v1288 = vpack.c.b16 %v1276, %v1275
            %v1289 = vpack.c.b16 %v1278, %v1277
            %v1290 = vpack.c.b16 %v1280, %v1279
            %v1291 = vpack.c.b16 %v1282, %v1281
            %v1292 = vpack.c.b16 %v1284, %v1283
            %1301 = vmatprep.subr.bf16.mxu0 0
            %1302 = vmatpush1.bf16.msra.mxu0 %v1292
            %1303 = vmatprep.subr.bf16.mxu0 0
            %1304 = vmatpush1.bf16.msra.mxu0 %v1291
            %1305 = vmatprep.subr.bf16.mxu0 0
            %1306 = vmatpush1.bf16.msra.mxu0 %v1290
            %1307 = vmatprep.subr.bf16.mxu0 0
            %1308 = vmatpush1.bf16.msra.mxu0 %v1289
            %1309 = vmatprep.subr.bf16.mxu0 0
            %1310 = vmatpush1.bf16.msra.mxu0 %v1288
            %1311 = vmatprep.subr.bf16.mxu0 0
            %1312 = vmatpush1.bf16.msra.mxu0 %v1287
            %1313 = vmatprep.subr.bf16.mxu0 0
            %1314 = vmatpush1.bf16.msra.mxu0 %v1286
            %1315 = vmatprep.subr.bf16.mxu0 0
            %1316 = vmatpush1.bf16.msra.mxu0 %v1285
            %1317 = vmatprep.subr.bf16.mxu0 0
            %1318 = vmatpush2.bf16.msra.mxu0 0
            %1319 = vmatprep.subr.bf16.mxu0 0
            %1320 = vmatpush2.bf16.msra.mxu0 0
            %1321 = vmatprep.subr.bf16.mxu0 0
            %1322 = vmatpush2.bf16.msra.mxu0 0
            %1323 = vmatprep.subr.bf16.mxu0 0
            %1324 = vmatpush2.bf16.msra.mxu0 0
            %1325 = vmatprep.subr.bf16.mxu0 0
            %1326 = vmatpush2.bf16.msra.mxu0 0
            %1327 = vmatprep.subr.bf16.mxu0 0
            %1328 = vmatpush2.bf16.msra.mxu0 0
            %1329 = vmatprep.subr.bf16.mxu0 0
            %1330 = vmatpush2.bf16.msra.mxu0 0
            %1331 = vmatprep.subr.bf16.mxu0 0
            %1332 = vmatpush2.bf16.msra.mxu0 0
            %1333 = vmatprep.mubr.bf16.mxu0 0
            %1334 = vmatmul.mubr.bf16.gmra.mxu0 %v1222
            %v1335 = vpop.f32.mrf.mxu0
            %v1336 = vadd.f32 %v1251, %v1335
            %v1337 = vpop.f32.mrf.mxu0
            %v1338 = vpop.f32.mrf.mxu0
            %v1339 = vadd.f32 %v1251, %v1338
            %v1340 = vpop.f32.mrf.mxu0
            %1341 = vmatprep.mubr.bf16.mxu0 0
            %1342 = vmatmul.mubr.bf16.gmra.mxu0 %v1223
            %v1343 = vpop.f32.mrf.mxu0
            %v1344 = vadd.f32 %v1251, %v1343
            %v1345 = vpop.f32.mrf.mxu0
            %v1346 = vpop.f32.mrf.mxu0
            %v1347 = vadd.f32 %v1251, %v1346
            %v1348 = vpop.f32.mrf.mxu0
            %1349 = vmatprep.mubr.bf16.mxu0 0
            %1350 = vmatmul.mubr.bf16.gmra.mxu0 %v1224
            %v1351 = vpop.f32.mrf.mxu0
            %v1352 = vadd.f32 %v1251, %v1351
            %v1353 = vpop.f32.mrf.mxu0
            %v1354 = vpop.f32.mrf.mxu0
            %v1355 = vadd.f32 %v1251, %v1354
            %v1356 = vpop.f32.mrf.mxu0
            %1357 = vmatprep.mubr.bf16.mxu0 0
            %1358 = vmatmul.mubr.bf16.gmra.mxu0 %v1225
            %v1359 = vpop.f32.mrf.mxu0
            %v1360 = vadd.f32 %v1251, %v1359
            %v1361 = vpop.f32.mrf.mxu0
            %v1362 = vpop.f32.mrf.mxu0
            %v1363 = vadd.f32 %v1251, %v1362
            %v1364 = vpop.f32.mrf.mxu0
            %1365 = vmatprep.mubr.bf16.mxu0 0
            %1366 = vmatmul.mubr.bf16.gmra.mxu0 %v1226
            %v1367 = vpop.f32.mrf.mxu0
            %v1368 = vadd.f32 %v1251, %v1367
            %v1369 = vpop.f32.mrf.mxu0
            %v1370 = vpop.f32.mrf.mxu0
            %v1371 = vadd.f32 %v1251, %v1370
            %v1372 = vpop.f32.mrf.mxu0
            %1373 = vmatprep.mubr.bf16.mxu0 0
            %1374 = vmatmul.mubr.bf16.gmra.mxu0 %v1227
            %v1375 = vpop.f32.mrf.mxu0
            %v1376 = vadd.f32 %v1251, %v1375
            %v1377 = vpop.f32.mrf.mxu0
            %v1378 = vpop.f32.mrf.mxu0
            %v1379 = vadd.f32 %v1251, %v1378
            %v1380 = vpop.f32.mrf.mxu0
            %1381 = vmatprep.mubr.bf16.mxu0 0
            %1382 = vmatmul.mubr.bf16.gmra.mxu0 %v1228
            %v1383 = vpop.f32.mrf.mxu0
            %v1384 = vadd.f32 %v1251, %v1383
            %v1385 = vpop.f32.mrf.mxu0
            %v1386 = vpop.f32.mrf.mxu0
            %v1387 = vadd.f32 %v1251, %v1386
            %v1388 = vpop.f32.mrf.mxu0
            %1389 = vmatprep.mubr.bf16.mxu0 0
            %1390 = vmatmul.mubr.bf16.gmra.mxu0 %v1229
            %v1391 = vpop.f32.mrf.mxu0
            %v1392 = vadd.f32 %v1251, %v1391
            %v1393 = vpop.f32.mrf.mxu0
            %v1394 = vpop.f32.mrf.mxu0
            %v1395 = vadd.f32 %v1251, %v1394
            %v1396 = vpop.f32.mrf.mxu0
            %1397 = vdwg.mxu0
            %v1398 = vld [vmem:[%s428] sm:$0x1]
            %v1399 = vpack.c.bf16 %v1339, %v1336
            %v1400 = vpack.c.bf16 %v1347, %v1344
            %v1401 = vpack.c.bf16 %v1355, %v1352
            %v1402 = vpack.c.bf16 %v1363, %v1360
            %v1403 = vpack.c.bf16 %v1371, %v1368
            %v1404 = vpack.c.bf16 %v1379, %v1376
            %v1405 = vpack.c.bf16 %v1387, %v1384
            %v1406 = vpack.c.bf16 %v1395, %v1392
            %1407 = vmatprep.subr.bf16.mxu0 0
            %1408 = vmatpush1.bf16.msra.mxu0 %v1406
            %1409 = vmatprep.subr.bf16.mxu0 0
            %1410 = vmatpush1.bf16.msra.mxu0 %v1405
            %1411 = vmatprep.subr.bf16.mxu0 0
            %1412 = vmatpush1.bf16.msra.mxu0 %v1404
            %1413 = vmatprep.subr.bf16.mxu0 0
            %1414 = vmatpush1.bf16.msra.mxu0 %v1403
            %1415 = vmatprep.subr.bf16.mxu0 0
            %1416 = vmatpush1.bf16.msra.mxu0 %v1402
            %1417 = vmatprep.subr.bf16.mxu0 0
            %1418 = vmatpush1.bf16.msra.mxu0 %v1401
            %1419 = vmatprep.subr.bf16.mxu0 0
            %1420 = vmatpush1.bf16.msra.mxu0 %v1400
            %1421 = vmatprep.subr.bf16.mxu0 0
            %1422 = vmatpush1.bf16.msra.mxu0 %v1399
            %1423 = vmatprep.subr.bf16.mxu0 0
            %1424 = vmatpush2.bf16.msra.mxu0 0
            %1425 = vmatprep.subr.bf16.mxu0 0
            %1426 = vmatpush2.bf16.msra.mxu0 0
            %1427 = vmatprep.subr.bf16.mxu0 0
            %1428 = vmatpush2.bf16.msra.mxu0 0
            %1429 = vmatprep.subr.bf16.mxu0 0
            %1430 = vmatpush2.bf16.msra.mxu0 0
            %1431 = vmatprep.subr.bf16.mxu0 0
            %1432 = vmatpush2.bf16.msra.mxu0 0
            %1433 = vmatprep.subr.bf16.mxu0 0
            %1434 = vmatpush2.bf16.msra.mxu0 0
            %1435 = vmatprep.subr.bf16.mxu0 0
            %1436 = vmatpush2.bf16.msra.mxu0 0
            %1437 = vmatprep.subr.bf16.mxu0 0
            %1438 = vmatpush2.bf16.msra.mxu0 0
            %1439 = vmatprep.mubr.bf16.mxu0 0
            %1440 = vmatmul.mubr.bf16.gmra.mxu0 %v1398
            %v1441 = vpop.f32.mrf.mxu0
            %v1442 = vadd.f32 0.0, %v1441
            %v1443 = vpop.f32.mrf.mxu0
            %v1444 = vpop.f32.mrf.mxu0
            %v1445 = vpop.f32.mrf.mxu0
            %1446 = vdwg.mxu0
            // Predicated region
            $region116: #{tpu_custom_call.1} parent=114 // pred_check
              %p1447 = pneg %p431
            $region117: #{tpu_custom_call.1} parent=114 // pred_check_branch
              %1449 = sbr.rel (%p1447) target = $region119
            $region118: #{tpu_custom_call.1} parent=114 // pred_region
              %1450 = vst [vmem:[#allocation4] sm:$0x3] 0.0
            $region119: #{tpu_custom_call.1} parent=114 // pred_fallthru
              _
            %v1451 = vld [vmem:[#allocation4] sm:$0x3]
            %v1452 = vadd.f32 %v1451, %v1442
            %1453 = vst [vmem:[#allocation4] sm:$0x3] %v1452
            // Predicated region
            $region120: #{tpu_custom_call.1} parent=114 // pred_check
              %p1454 = pneg %p431
            $region121: #{tpu_custom_call.1} parent=114 // pred_check_branch
              %1456 = sbr.rel (%p1454) target = $region123
            $region122: #{tpu_custom_call.1} parent=114 // pred_region
              %v1457 = vld [vmem:[#allocation4] sm:$0x3]
              %v1458 = vpack.c.bf16 %v1457, %v1457
              %v1459 = vld [vmem:[%s8] sm:$0xf]
              %v1460 = vld [vmem:[%s8 + $0x4] sm:$0xf]
              %v1461 = vld [vmem:[%s8 + $0x8] sm:$0xf]
              %v1462 = vld [vmem:[%s8 + $0xc] sm:$0xf]
              %v1463 = vld [vmem:[%s8 + $0x10] sm:$0xf]
              %v1464 = vld [vmem:[%s8 + $0x14] sm:$0xf]
              %v1465 = vld [vmem:[%s8 + $0x18] sm:$0xf]
              %v1466 = vld [vmem:[%s8 + $0x1c] sm:$0xf]
              %v1467 = vld [vmem:[%s8 + $0x20] sm:$0xf]
              %v1468 = vld [vmem:[%s8 + $0x24] sm:$0xf]
              %v1469 = vld [vmem:[%s8 + $0x28] sm:$0xf]
              %v1470 = vld [vmem:[%s8 + $0x2c] sm:$0xf]
              %v1471 = vld [vmem:[%s8 + $0x30] sm:$0xf]
              %v1472 = vld [vmem:[%s8 + $0x34] sm:$0xf]
              %v1473 = vld [vmem:[%s8 + $0x38] sm:$0xf]
              %v1474 = vld [vmem:[%s8 + $0x3c] sm:$0xf]
              %v1475 = vld [vmem:[%s9] sm:$0x1]
              %v1477 = vlaneseq
              %v1478 = vshrl.u32 %v1477, 7
              %v1479 = vsub.s32 0, %v1478
              %v1480 = vrot.slane %v1475, %v1479
              %v1498 = vunpack.c.l.b16 %v1459
              %v1499 = vunpack.c.l.b16 %v1460
              %v1500 = vunpack.c.l.b16 %v1461
              %v1501 = vunpack.c.l.b16 %v1462
              %v1502 = vunpack.c.l.b16 %v1463
              %v1503 = vunpack.c.l.b16 %v1464
              %v1504 = vunpack.c.l.b16 %v1465
              %v1505 = vunpack.c.l.b16 %v1466
              %v1506 = vunpack.c.l.b16 %v1467
              %v1507 = vunpack.c.l.b16 %v1468
              %v1508 = vunpack.c.l.b16 %v1469
              %v1509 = vunpack.c.l.b16 %v1470
              %v1510 = vunpack.c.l.b16 %v1471
              %v1511 = vunpack.c.l.b16 %v1472
              %v1512 = vunpack.c.l.b16 %v1473
              %v1513 = vunpack.c.l.b16 %v1474
              %v1514 = vpack.c.b16 %v1499, %v1498
              %v1515 = vpack.c.b16 %v1501, %v1500
              %v1516 = vpack.c.b16 %v1503, %v1502
              %v1517 = vpack.c.b16 %v1505, %v1504
              %v1518 = vpack.c.b16 %v1507, %v1506
              %v1519 = vpack.c.b16 %v1509, %v1508
              %v1520 = vpack.c.b16 %v1511, %v1510
              %v1521 = vpack.c.b16 %v1513, %v1512
              %1530 = vmatprep.subr.bf16.mxu0 0
              %1531 = vmatpush1.bf16.msra.mxu0 %v1521
              %1532 = vmatprep.subr.bf16.mxu0 0
              %1533 = vmatpush1.bf16.msra.mxu0 %v1520
              %1534 = vmatprep.subr.bf16.mxu0 0
              %1535 = vmatpush1.bf16.msra.mxu0 %v1519
              %1536 = vmatprep.subr.bf16.mxu0 0
              %1537 = vmatpush1.bf16.msra.mxu0 %v1518
              %1538 = vmatprep.subr.bf16.mxu0 0
              %1539 = vmatpush1.bf16.msra.mxu0 %v1517
              %1540 = vmatprep.subr.bf16.mxu0 0
              %1541 = vmatpush1.bf16.msra.mxu0 %v1516
              %1542 = vmatprep.subr.bf16.mxu0 0
              %1543 = vmatpush1.bf16.msra.mxu0 %v1515
              %1544 = vmatprep.subr.bf16.mxu0 0
              %1545 = vmatpush1.bf16.msra.mxu0 %v1514
              %1546 = vmatprep.subr.bf16.mxu0 0
              %1547 = vmatpush2.bf16.msra.mxu0 0
              %1548 = vmatprep.subr.bf16.mxu0 0
              %1549 = vmatpush2.bf16.msra.mxu0 0
              %1550 = vmatprep.subr.bf16.mxu0 0
              %1551 = vmatpush2.bf16.msra.mxu0 0
              %1552 = vmatprep.subr.bf16.mxu0 0
              %1553 = vmatpush2.bf16.msra.mxu0 0
              %1554 = vmatprep.subr.bf16.mxu0 0
              %1555 = vmatpush2.bf16.msra.mxu0 0
              %1556 = vmatprep.subr.bf16.mxu0 0
              %1557 = vmatpush2.bf16.msra.mxu0 0
              %1558 = vmatprep.subr.bf16.mxu0 0
              %1559 = vmatpush2.bf16.msra.mxu0 0
              %1560 = vmatprep.subr.bf16.mxu0 0
              %1561 = vmatpush2.bf16.msra.mxu0 0
              %1562 = vmatprep.mubr.bf16.mxu0 0
              %1563 = vmatmul.mubr.bf16.gmra.mxu0 %v1458
              %v1564 = vpop.f32.mrf.mxu0
              %v1565 = vadd.f32 %v1480, %v1564
              %v1566 = vpop.f32.mrf.mxu0
              %v1567 = vpop.f32.mrf.mxu0
              %v1568 = vpop.f32.mrf.mxu0
              %1569 = vdwg.mxu0
              %vm1570 = vcmask 25600
              %1571 = vst.msk [vmem:[#allocation8] sm:$0x3] %vm1570, %v1565
              %v1572 = vsel %vm1570, %v1565, -inf
              %1573 = vmax.xlane.f32.xlu0 %v1572
              %v1574 = vpop.xlane.xlu0 %1573
              %v1575 = vsub.f32 %v1565, %v1574
              %v1576 = vmul.f32 %v1575, 1.442695
              %v1577 = vpow.pop %v1576
              %v1578 = vsel %vm1570, %v1577, 0.0
              %1579 = vadd.xlane.f32.xlu0 %v1578
              %v1580 = vpop.xlane.xlu0 %1579
              %v1581 = vrcp.pop %v1580
              %v1582 = vmul.f32 %v1577, %v1581
              %vm1583 = vcmask 58400
              %v1584 = vsel %vm1583, %v1565, -inf
              %1585 = vmax.xlane.f32.xlu0 %v1584
              %v1586 = vpop.xlane.xlu0 %1585
              %v1587 = vsub.f32 %v1565, %v1586
              %v1588 = vmul.f32 %v1587, 1.442695
              %v1589 = vpow.pop %v1588
              %1591 = vrot.lane.b32.xlu0 %v1589, 124
              %v1592 = vpop.permute.xlu0 %1591
              %v1594 = vsel %vm1570, %v1592, 0.0
              %1595 = vadd.xlane.f32.xlu0 %v1594
              %v1596 = vpop.xlane.xlu0 %1595
              %v1597 = vrcp.pop %v1596
              %v1598 = vmul.f32 %v1589, %v1597
              %vm1599 = vcmask 91200
              %v1600 = vsel %vm1599, %v1565, -inf
              %1601 = vmax.xlane.f32.xlu0 %v1600
              %v1602 = vpop.xlane.xlu0 %1601
              %v1603 = vsub.f32 %v1565, %v1602
              %v1604 = vmul.f32 %v1603, 1.442695
              %v1605 = vpow.pop %v1604
              %1607 = vrot.lane.b32.xlu0 %v1605, 120
              %v1608 = vpop.permute.xlu0 %1607
              %v1610 = vsel %vm1570, %v1608, 0.0
              %1611 = vadd.xlane.f32.xlu0 %v1610
              %v1612 = vpop.xlane.xlu0 %1611
              %v1613 = vrcp.pop %v1612
              %v1614 = vmul.f32 %v1605, %v1613
              %vm1615 = vcmask 124000
              %v1616 = vsel %vm1615, %v1565, -inf
              %1617 = vmax.xlane.f32.xlu0 %v1616
              %v1618 = vpop.xlane.xlu0 %1617
              %v1619 = vsub.f32 %v1565, %v1618
              %v1620 = vmul.f32 %v1619, 1.442695
              %v1621 = vpow.pop %v1620
              %1623 = vrot.lane.b32.xlu0 %v1621, 116
              %v1624 = vpop.permute.xlu0 %1623
              %v1626 = vsel %vm1570, %v1624, 0.0
              %1627 = vadd.xlane.f32.xlu0 %v1626
              %v1628 = vpop.xlane.xlu0 %1627
              %v1629 = vrcp.pop %v1628
              %v1630 = vmul.f32 %v1621, %v1629
              %v1631 = vadd.f32 %v1582, 0.0
              %1633 = vrot.lane.b32.xlu0 %v1598, 124
              %v1634 = vpop.permute.xlu0 %1633
              %v1636 = vadd.f32 %v1631, %v1634
              %1638 = vrot.lane.b32.xlu0 %v1614, 120
              %v1639 = vpop.permute.xlu0 %1638
              %v1641 = vadd.f32 %v1636, %v1639
              %1643 = vrot.lane.b32.xlu0 %v1630, 116
              %v1644 = vpop.permute.xlu0 %1643
              %v1646 = vadd.f32 %v1641, %v1644
              %v1647 = vrcp.pop 4.0
              %v1648 = vmul.f32 %v1646, %v1647
              %v1649 = vsub.f32 %v1582, %v1648
              %v1650 = vmul.f32 %v1649, %v1649
              %v1651 = vsel %vm1570, %v1650, 0.0
              %1652 = vadd.xlane.f32.xlu0 %v1651
              %v1653 = vpop.xlane.xlu0 %1652
              %vm1654 = vcmask 1024
              %v1655 = vsel %vm1654, %v1653, 0.0
              %1656 = vadd.xlane.f32.xlu0 %v1655
              %v1657 = vpop.xlane.xlu0 %1656
              %v1658 = vrot.slane %v1657, 4
              %v1659 = vadd.f32 %v1657, %v1658
              %v1660 = vrot.slane %v1659, 2
              %v1661 = vadd.f32 %v1659, %v1660
              %v1662 = vrot.slane %v1661, 1
              %v1663 = vadd.f32 %v1661, %v1662
              %s1664 = vtos %v1663
              %v1665 = vstv %s1664
              %v1666 = vrcp.pop 2.0
              %v1667 = vmul.f32 %v1665, %v1666
              %v1668 = vadd.f32 %v1667, 0.0
              %1670 = vrot.lane.b32.xlu0 %v1648, 4
              %v1671 = vpop.permute.xlu0 %1670
              %v1673 = vsub.f32 %v1598, %v1671
              %v1674 = vmul.f32 %v1673, %v1673
              %1676 = vrot.lane.b32.xlu0 %v1674, 124
              %v1677 = vpop.permute.xlu0 %1676
              %v1679 = vsel %vm1570, %v1677, 0.0
              %1680 = vadd.xlane.f32.xlu0 %v1679
              %v1681 = vpop.xlane.xlu0 %1680
              %v1682 = vsel %vm1654, %v1681, 0.0
              %1683 = vadd.xlane.f32.xlu0 %v1682
              %v1684 = vpop.xlane.xlu0 %1683
              %v1685 = vrot.slane %v1684, 4
              %v1686 = vadd.f32 %v1684, %v1685
              %v1687 = vrot.slane %v1686, 2
              %v1688 = vadd.f32 %v1686, %v1687
              %v1689 = vrot.slane %v1688, 1
              %v1690 = vadd.f32 %v1688, %v1689
              %s1691 = vtos %v1690
              %v1692 = vstv %s1691
              %v1693 = vmul.f32 %v1692, %v1666
              %v1694 = vadd.f32 %v1668, %v1693
              %1695 = vrot.lane.b32.xlu0 %v1648, 8
              %v1696 = vpop.permute.xlu0 %1695
              %v1698 = vsub.f32 %v1614, %v1696
              %v1699 = vmul.f32 %v1698, %v1698
              %1701 = vrot.lane.b32.xlu0 %v1699, 120
              %v1702 = vpop.permute.xlu0 %1701
              %v1704 = vsel %vm1570, %v1702, 0.0
              %1705 = vadd.xlane.f32.xlu0 %v1704
              %v1706 = vpop.xlane.xlu0 %1705
              %v1707 = vsel %vm1654, %v1706, 0.0
              %1708 = vadd.xlane.f32.xlu0 %v1707
              %v1709 = vpop.xlane.xlu0 %1708
              %v1710 = vrot.slane %v1709, 4
              %v1711 = vadd.f32 %v1709, %v1710
              %v1712 = vrot.slane %v1711, 2
              %v1713 = vadd.f32 %v1711, %v1712
              %v1714 = vrot.slane %v1713, 1
              %v1715 = vadd.f32 %v1713, %v1714
              %s1716 = vtos %v1715
              %v1717 = vstv %s1716
              %v1718 = vmul.f32 %v1717, %v1666
              %v1719 = vadd.f32 %v1694, %v1718
              %1720 = vrot.lane.b32.xlu0 %v1648, 12
              %v1721 = vpop.permute.xlu0 %1720
              %v1723 = vsub.f32 %v1630, %v1721
              %v1724 = vmul.f32 %v1723, %v1723
              %1726 = vrot.lane.b32.xlu0 %v1724, 116
              %v1727 = vpop.permute.xlu0 %1726
              %v1729 = vsel %vm1570, %v1727, 0.0
              %1730 = vadd.xlane.f32.xlu0 %v1729
              %v1731 = vpop.xlane.xlu0 %1730
              %v1732 = vsel %vm1654, %v1731, 0.0
              %1733 = vadd.xlane.f32.xlu0 %v1732
              %v1734 = vpop.xlane.xlu0 %1733
              %v1735 = vrot.slane %v1734, 4
              %v1736 = vadd.f32 %v1734, %v1735
              %v1737 = vrot.slane %v1736, 2
              %v1738 = vadd.f32 %v1736, %v1737
              %v1739 = vrot.slane %v1738, 1
              %v1740 = vadd.f32 %v1738, %v1739
              %s1741 = vtos %v1740
              %v1742 = vstv %s1741
              %v1743 = vmul.f32 %v1742, %v1666
              %v1744 = vadd.f32 %v1719, %v1743
              %v1745 = vmul.f32 %v1744, %v1647
              %v1746 = vadd.f32 %v1648, 1e-08
              %v1747 = vlog2.pop %v1746
              %v1748 = vmul.f32 %v1747, 0.6931472
              %v1749 = vmul.f32 %v1648, %v1748
              %v1750 = vsel %vm1570, %v1749, 0.0
              %1751 = vadd.xlane.f32.xlu0 %v1750
              %v1752 = vpop.xlane.xlu0 %1751
              %v1753 = vsel %vm1654, %v1752, 0.0
              %1754 = vadd.xlane.f32.xlu0 %v1753
              %v1755 = vpop.xlane.xlu0 %1754
              %v1756 = vrot.slane %v1755, 4
              %v1757 = vadd.f32 %v1755, %v1756
              %v1758 = vrot.slane %v1757, 2
              %v1759 = vadd.f32 %v1757, %v1758
              %v1760 = vrot.slane %v1759, 1
              %v1761 = vadd.f32 %v1759, %v1760
              %s1762 = vtos %v1761
              %v1763 = vstv %s1762
              %v1764 = vmul.f32 %v1763, %v1666
              %v1765 = vsub.f32 0.0, %v1764
              %v1766 = vadd.f32 %v1745, %v1765
              %vm1767 = vcmask 0
              %1768 = vst.msk [vmem:[#allocation9] sm:$0x1] %vm1767, %v1766
            $region123: #{tpu_custom_call.1} parent=114 // pred_fallthru
              _
          $region115: #{tpu_custom_call.1} parent=106 // pred_fallthru
            _
        $region107: #{tpu_custom_call.1} parent=55 // pred_fallthru
          _
        // Predicated region
        $region124: #{tpu_custom_call.1} parent=55 // pred_check
          %p1769 = pneg %p264
        $region125: #{tpu_custom_call.1} parent=55 // pred_check_branch
          %1771 = sbr.rel (%p1769) target = $region127
        $region126: #{tpu_custom_call.1} parent=55 // pred_region
          %s1773 = ssub.s32 32, 32
          %1774 = vsyncadd [#allocation7], %s1773
          %s1776 = sshll.u32 [#allocation8], 4
          %s1777 = int_to_ptr.vmem [resolvable:$true] %s1776
          %1779 = dma.vmem_to_hbm [thread:$0]  %s1777, 32, %s10, [#allocation7]
        $region127: #{tpu_custom_call.1} parent=55 // pred_fallthru
          _
        // Predicated region
        $region128: #{tpu_custom_call.1} parent=55 // pred_check
          %p1780 = pneg %p285
        $region129: #{tpu_custom_call.1} parent=55 // pred_check_branch
          %1782 = sbr.rel (%p1780) target = $region131
        $region130: #{tpu_custom_call.1} parent=55 // pred_region
          %s1784 = ssub.s32 16, 16
          %1785 = vsyncadd [#allocation10], %s1784
          %s1787 = sshll.u32 [#allocation9], 4
          %s1788 = int_to_ptr.vmem [resolvable:$true] %s1787
          %1790 = dma.vmem_to_hbm [thread:$0]  %s1788, 16, %s11, [#allocation10]
        $region131: #{tpu_custom_call.1} parent=55 // pred_fallthru
          _
        // Predicated region
        $region132: #{tpu_custom_call.1} parent=55 // pred_check
          %p1791 = pneg %p264
        $region133: #{tpu_custom_call.1} parent=55 // pred_check_branch
          %1793 = sbr.rel (%p1791) target = $region135
        $region134: #{tpu_custom_call.1} parent=55 // pred_region
          %1794 = dma.done [#allocation7], 32
        $region135: #{tpu_custom_call.1} parent=55 // pred_fallthru
          _
        // Predicated region
        $region136: #{tpu_custom_call.1} parent=55 // pred_check
          %p1795 = pneg %p285
        $region137: #{tpu_custom_call.1} parent=55 // pred_check_branch
          %1797 = sbr.rel (%p1795) target = $region139
        $region138: #{tpu_custom_call.1} parent=55 // pred_region
          %1798 = dma.done [#allocation10], 16
        $region139: #{tpu_custom_call.1} parent=55 // pred_fallthru
          _
      $region56: #{tpu_custom_call.1} parent=5 // pred_fallthru
        _
      %p1799 = scmp.le.s32.totalorder 2, %s21
      // Predicated region
      $region140: #{tpu_custom_call.1} parent=5 // pred_check
        %p1800 = pneg %p1799
      $region141: #{tpu_custom_call.1} parent=5 // pred_check_branch
        %1802 = sbr.rel (%p1800) target = $region143
      $region142: #{tpu_custom_call.1} parent=5 // pred_region
        %s1803 = ssub.s32 %s21, 2
      $region143: #{tpu_custom_call.1} parent=5 // pred_fallthru
        _
    $region6: #{tpu_custom_call.1} parent=1 // loop_footer
      %s25 = sadd.s32 1, %s21
    $region7: #{tpu_custom_call.1} parent=1 // loop_footer_branch
      %20 = sbr.rel target = $region3
    $region8: #{tpu_custom_call.1} parent=1 // loop_exit
      _
    %1804 = vsyncpa [#allocation6], 1
    %s1805 = scalar_lea.sflag [#allocation6], 1
    %1806 = vsyncpa %s1805, 1
    %1807 = vsyncpa [#allocation7], 1
    %s1808 = scalar_lea.sflag [#allocation7], 1
    %1809 = vsyncpa %s1808, 1
    %1810 = vsyncpa [#allocation10], 1

</llo_original>
